<compile_context>
chip_gen: v7x
topology: tpu7x:2x2x1
jax: 0.10.0
libtpu: 0.0.40
codegen_flags: <defaults>
</compile_context>

<pallas_src>
import jax
import jax.numpy as jnp
from jax.experimental import pallas as pl
from jax.experimental.pallas import tpu as pltpu

# ----------------------------- hyper params ---------------------------------
NUM_NODE_FTS   = 8                      # num_of_node_fts
NUM_EDGE_FTS   = 4                      # num_of_edge_fts
HID_DIM        = 16                     # hid_dim
ATOMIC_EMB     = 16                     # atomic_emb
TOWERS         = 1
D_TOTAL        = HID_DIM + ATOMIC_EMB   # 32
EDGE_DIM       = D_TOTAL // TOWERS      # 32 (type_net='tower' edge proj dim)
MLP_HID        = D_TOTAL // 2           # 16
NUM_ATOM_TYPES = 10                     # nn.Embedding(10, atomic_emb)
ATOM_PAD       = 16                     # atom one-hot width (10 real, padded)

LANES = 128

# ---- per grid-step (molecule-batch tile) sizes: scaled up per the review ----
N_NODES_T  = 256                        # node rows per tile   (MXU M = 256)
N_EDGES_T  = 512                        # edges per tile
N_GRAPHS_T = 32                         # graphs per tile
NUM_TILES  = 4                          # molecule tiles per pallas_call (grid)

N_PAD         = N_NODES_T               # 256
B_PAD         = 32                      # graph rows (== N_GRAPHS_T here)
EDGES_PER_ROW = 4                       # 4 edges * 32 out fts = 128 lanes (dense)
E_ROWS        = N_EDGES_T // EDGES_PER_ROW          # 128
EDGE_PACK_IN  = EDGES_PER_ROW * NUM_EDGE_FTS        # 16
N_CHUNKS      = N_PAD // LANES          # 2 (transposed batch one-hot chunks)

# ---- data-slab column layout (node rows) ----
COL_FTS = 0                             # cols 0:8   node features
COL_OHA = NUM_NODE_FTS                  # cols 8:24  one-hot(atomic_num)
CAT_IN  = 32                            # cols 0:32  = [fts | oh_atom | zero pad]
COL_CNT = 64                            # (edge rows) per-graph node counts column

# ---- data-slab row layout ----
ROW_EDGE  = N_PAD                       # 256: packed edge rows (E_ROWS of them)
OHBT_ROW  = ROW_EDGE + E_ROWS           # 384: transposed batch one-hot blocks
DATA_ROWS = OHBT_ROW + N_CHUNKS * B_PAD # 448

# ---- packed-parameter slab row layout ----
ROW_WCAT  = 0      # (32, 32)  folded node weight [w_node_c ; emb_c ; 0]
ROW_BIAS  = 32     # (1, 32)   fused bias
ROW_WEDGE = 40     # (16, 128) block-diagonal edge weight (4 copies of w_edge)
ROW_BEDGE = 56     # (1, 128)  lane-tiled edge bias
ROW_WM1   = 64     # (32, 16)  readout MLP layer 1 weight
ROW_BM1   = 96     # (1, 16)   readout MLP layer 1 bias
ROW_WM2   = 104    # (16, 128) readout MLP layer 2 weight (col 0 real)
ROW_BM2   = 120    # (1, 128)  readout MLP layer 2 bias (col 0 real)
PARAM_ROWS = 128


# ------------------------------- kernel -------------------------------------
def gad_kernel(data_ref, params_ref, graph_ref, edge_ref):
    """One molecule-batch tile of the fused GAD forward on packed bf16 slabs."""
    f32 = jnp.float32

    # ---- static views into the packed parameter slab (one resident buffer) ----
    w_cat  = params_ref[ROW_WCAT:ROW_WCAT + CAT_IN, 0:D_TOTAL]              # (32, 32) bf16
    b_cat  = params_ref[ROW_BIAS:ROW_BIAS + 1, 0:D_TOTAL].astype(f32)       # (1, 32)
    w_edge = params_ref[ROW_WEDGE:ROW_WEDGE + EDGE_PACK_IN, :]              # (16, 128) bf16
    b_edge = params_ref[ROW_BEDGE:ROW_BEDGE + 1, :].astype(f32)             # (1, 128)
    w_m1   = params_ref[ROW_WM1:ROW_WM1 + D_TOTAL, 0:MLP_HID].astype(f32)   # (32, 16)
    b_m1   = params_ref[ROW_BM1:ROW_BM1 + 1, 0:MLP_HID].astype(f32)         # (1, 16)
    w_m2   = params_ref[ROW_WM2:ROW_WM2 + MLP_HID, :].astype(f32)           # (16, 128) col 0 real
    b_m2   = params_ref[ROW_BM2:ROW_BM2 + 1, :].astype(f32)                 # (1, 128)

    # ---- packed per-tile data (single bf16 slab, one DMA) ----
    node_cat = data_ref[0:N_PAD, 0:CAT_IN]                                  # (256, 32) bf16
    edge_in  = data_ref[ROW_EDGE:ROW_EDGE + E_ROWS, 0:EDGE_PACK_IN]         # (128, 16) bf16
    counts   = data_ref[ROW_EDGE:ROW_EDGE + B_PAD,
                        COL_CNT:COL_CNT + 1].astype(f32)                    # (32, 1) exact ints

    # 1) layer_first_edge: 4 edges per 128-lane row against a block-diagonal weight,
    #    giving a fully lane-dense (128, 128) output (no dead writeback lanes).
    edge_out = jnp.dot(edge_in, w_edge, preferred_element_type=f32) + b_edge
    edge_ref[...] = edge_out.astype(edge_ref.dtype)

    # 2) Folded affine node chain:
    #    layer_first_node (+) emb_automic -> layer_first -> [GAD_layer stack] -> layer_last.
    #    node_cat already holds [node_fts | one-hot(atomic_num)], so the whole chain
    #    collapses to ONE (256, 32) x (32, 32) matmul plus one fused bias.
    # TODO(synk): GAD_layer (diffusion message passing) is not defined in the provided
    # source and is treated as identity; that identity is what makes this fold valid.
    h = jnp.dot(node_cat, w_cat, preferred_element_type=f32) + b_cat        # (256, 32)

    # 3) scatter(output, batch_idx, reduce='mean'): the batch one-hot is stored
    #    PRE-TRANSPOSED on the host, so the segment sum is a plain MXU matmul
    #    (no in-kernel transpose), and the mean uses exact division by the
    #    host-computed node counts (no approx reciprocal).
    sums = jnp.zeros((B_PAD, D_TOTAL), f32)
    for c in range(N_CHUNKS):                                  # static, unrolled (2 iters)
        oh_bt = data_ref[OHBT_ROW + c * B_PAD:
                         OHBT_ROW + (c + 1) * B_PAD, :].astype(f32)         # (32, 128)
        sums = sums + jnp.dot(oh_bt, h[c * LANES:(c + 1) * LANES, :],
                              preferred_element_type=f32)                   # (32, 32)
    g = sums / jnp.maximum(counts, 1.0)                                     # exact mean

    # 4) readout_MLP([D, D//2, 1]): Linear -> ReLU -> Linear; only lane 0 of the
    #    last layer is real and only that lane is written back.
    g = jnp.maximum(jnp.dot(g, w_m1, preferred_element_type=f32) + b_m1, 0.0)   # (32, 16)
    g = jnp.dot(g, w_m2, preferred_element_type=f32) + b_m2                     # (32, 128)
    graph_ref[...] = g[:, 0:1]                                                   # (32, 1)


# ------------------------------ packing helpers ------------------------------
def pack_params(params):
    """Fold the affine node chain and pack all parameters into one (128, 128) bf16 slab."""
    (w_edge, b_edge, emb, w_node, b_node, w_first, b_first,
     w_last, b_last, w_m1, b_m1, w_m2, b_m2) = params

    # Valid while the GAD_layer stack is identity (see TODO in the kernel):
    wf_top = w_first[:HID_DIM]                                    # (H, D)
    wf_bot = w_first[HID_DIM:]                                    # (A, D)
    w_node_c = w_node @ wf_top @ w_last                           # (num_node_fts, D)
    emb_c    = emb @ wf_bot @ w_last                              # (10, D)
    bias_c   = b_node @ wf_top @ w_last + b_first @ w_last + b_last   # (1, D)

    # 4-edge block-diagonal projection weight + lane-tiled bias (lane-dense output)
    w_edge_bd = jnp.zeros((EDGE_PACK_IN, LANES), jnp.float32)
    for j in range(EDGES_PER_ROW):
        w_edge_bd = w_edge_bd.at[j * NUM_EDGE_FTS:(j + 1) * NUM_EDGE_FTS,
                                 j * EDGE_DIM:(j + 1) * EDGE_DIM].set(w_edge)
    b_edge_t = jnp.tile(b_edge, (1, EDGES_PER_ROW))               # (1, 128)

    P = jnp.zeros((PARAM_ROWS, LANES), jnp.float32)
    P = P.at[ROW_WCAT:ROW_WCAT + NUM_NODE_FTS, 0:D_TOTAL].set(w_node_c)
    P = P.at[ROW_WCAT + NUM_NODE_FTS:
             ROW_WCAT + NUM_NODE_FTS + NUM_ATOM_TYPES, 0:D_TOTAL].set(emb_c)
    P = P.at[ROW_BIAS:ROW_BIAS + 1, 0:D_TOTAL].set(bias_c)
    P = P.at[ROW_WEDGE:ROW_WEDGE + EDGE_PACK_IN, :].set(w_edge_bd)
    P = P.at[ROW_BEDGE:ROW_BEDGE + 1, :].set(b_edge_t)
    P = P.at[ROW_WM1:ROW_WM1 + D_TOTAL, 0:MLP_HID].set(w_m1)
    P = P.at[ROW_BM1:ROW_BM1 + 1, 0:MLP_HID].set(b_m1)
    P = P.at[ROW_WM2:ROW_WM2 + MLP_HID, 0:1].set(w_m2)
    P = P.at[ROW_BM2:ROW_BM2 + 1, 0:1].set(b_m2)
    return P.astype(jnp.bfloat16)


def pack_data(node_fts, automic_num, edge_fts, batch_idx):
    """Pack per-tile node/edge/index data into one lane-dense (T, 448, 128) bf16 slab.

    Padded node rows must carry batch_idx == -1: their one-hot rows are then all
    zero so they contribute neither to any graph's sum nor to its count (fixes the
    padding invariant flagged in review). Padded edge rows should be zero-filled.
    """
    T = node_fts.shape[0]
    f32 = jnp.float32
    valid = (batch_idx >= 0).astype(f32)[..., None]                   # (T, N, 1)
    oh_a = jax.nn.one_hot(automic_num, ATOM_PAD, dtype=f32) * valid   # (T, N, 16)
    oh_b = jax.nn.one_hot(batch_idx, B_PAD, dtype=f32)                # (T, N, 32); -1 -> zeros
    counts = jnp.sum(oh_b, axis=1)                                    # (T, 32) exact ints <= 256

    slab = jnp.zeros((T, DATA_ROWS, LANES), f32)
    slab = slab.at[:, 0:N_PAD, COL_FTS:COL_FTS + NUM_NODE_FTS].set(node_fts * valid)
    slab = slab.at[:, 0:N_PAD, COL_OHA:COL_OHA + ATOM_PAD].set(oh_a)
    # 4 edges per 128-lane row: (T, E, 4) -> (T, E/4, 16), matching the block-diag weight
    slab = slab.at[:, ROW_EDGE:ROW_EDGE + E_ROWS, 0:EDGE_PACK_IN].set(
        edge_fts.reshape(T, E_ROWS, EDGE_PACK_IN))
    # per-graph node counts (exact small integers, exact in bf16) in a spare lane column
    slab = slab.at[:, ROW_EDGE:ROW_EDGE + B_PAD, COL_CNT].set(counts)
    # transposed batch one-hot, chunked along the node axis into (B_PAD, 128) blocks
    oh_bt = jnp.swapaxes(oh_b, 1, 2)                                  # (T, 32, N)
    for c in range(N_CHUNKS):
        slab = slab.at[:, OHBT_ROW + c * B_PAD:OHBT_ROW + (c + 1) * B_PAD, :].set(
            oh_bt[:, :, c * LANES:(c + 1) * LANES])
    return slab.astype(jnp.bfloat16)


# ------------------------------- wrapper -------------------------------------
@jax.jit
def gad_forward(node_fts, automic_num, edge_fts, batch_idx, params):
    """node_fts:(T,N,8) automic_num:(T,N) edge_fts:(T,E,4) batch_idx:(T,N)."""
    T = node_fts.shape[0]
    data = pack_data(node_fts, automic_num, edge_fts, batch_idx)      # (T, 448, 128) bf16
    pbuf = pack_params(params)                                        # (128, 128)    bf16

    graph_slab, edge_slab = pl.pallas_call(
        gad_kernel,
        out_shape=(
            jax.ShapeDtypeStruct((T, B_PAD, 1), jnp.float32),         # graph readout
            jax.ShapeDtypeStruct((T, E_ROWS, LANES), jnp.bfloat16),   # lane-dense edge proj
        ),
        grid=(T,),
        in_specs=[
            pl.BlockSpec((None, DATA_ROWS, LANES), lambda t: (t, 0, 0)),   # per-tile data
            pl.BlockSpec((PARAM_ROWS, LANES), lambda t: (0, 0)),           # params, resident
        ],
        out_specs=(
            pl.BlockSpec((None, B_PAD, 1), lambda t: (t, 0, 0)),
            pl.BlockSpec((None, E_ROWS, LANES), lambda t: (t, 0, 0)),
        ),
        compiler_params=pltpu.CompilerParams(dimension_semantics=("parallel",)),
    )(data, pbuf)

    graph_out = graph_slab[:, 0:N_GRAPHS_T, 0]                                    # (T, B)
    edge_out = edge_slab.reshape(T, N_EDGES_T, EDGE_DIM).astype(jnp.float32)      # (T, E, 32)
    return graph_out, edge_out


# --------------------------- pure-JAX references ------------------------------
def gad_reference(node_fts, automic_num, edge_fts, batch_idx, params):
    """Faithful f32 single-tile reference of the module's forward (unfolded)."""
    (w_edge, b_edge, emb, w_node, b_node, w_first, b_first,
     w_last, b_last, w_m1, b_m1, w_m2, b_m2) = params
    edge_proj = edge_fts @ w_edge + b_edge
    a_emb = emb[automic_num]
    h = jnp.concatenate([node_fts @ w_node + b_node, a_emb], axis=1) @ w_first + b_first
    # GAD_layer stack treated as identity (matches the kernel; see TODO there)
    h = h @ w_last + b_last
    oh = jax.nn.one_hot(batch_idx, N_GRAPHS_T, dtype=jnp.float32)
    g = (oh.T @ h) / jnp.maximum(oh.sum(0)[:, None], 1.0)
    g = jnp.maximum(g @ w_m1 + b_m1, 0.0)
    g = g @ w_m2 + b_m2
    return g[:, 0], edge_proj


def gad_packed_reference(data, pbuf):
    """Pure-JAX mirror of the kernel math on the same packed bf16 slabs (tight check)."""
    f32 = jnp.float32
    hp = jax.lax.Precision.HIGHEST
    d = data.astype(f32)
    p = pbuf.astype(f32)
    T = d.shape[0]

    w_cat  = p[ROW_WCAT:ROW_WCAT + CAT_IN, 0:D_TOTAL]
    b_cat  = p[ROW_BIAS:ROW_BIAS + 1, 0:D_TOTAL]
    w_edge = p[ROW_WEDGE:ROW_WEDGE + EDGE_PACK_IN, :]
    b_edge = p[ROW_BEDGE:ROW_BEDGE + 1, :]
    w_m1   = p[ROW_WM1:ROW_WM1 + D_TOTAL, 0:MLP_HID]
    b_m1   = p[ROW_BM1:ROW_BM1 + 1, 0:MLP_HID]
    w_m2   = p[ROW_WM2:ROW_WM2 + MLP_HID, :]
    b_m2   = p[ROW_BM2:ROW_BM2 + 1, :]

    node_cat = d[:, 0:N_PAD, 0:CAT_IN]
    edge_in  = d[:, ROW_EDGE:ROW_EDGE + E_ROWS, 0:EDGE_PACK_IN]
    counts   = d[:, ROW_EDGE:ROW_EDGE + B_PAD, COL_CNT][..., None]

    edge = jnp.einsum("tek,kn->ten", edge_in, w_edge, precision=hp) + b_edge
    edge = edge.astype(jnp.bfloat16).astype(f32).reshape(T, N_EDGES_T, EDGE_DIM)

    h = jnp.einsum("tnk,kd->tnd", node_cat, w_cat, precision=hp) + b_cat
    sums = jnp.zeros((T, B_PAD, D_TOTAL), f32)
    for c in range(N_CHUNKS):
        oh_bt = d[:, OHBT_ROW + c * B_PAD:OHBT_ROW + (c + 1) * B_PAD, :]
        sums = sums + jnp.einsum("tbn,tnd->tbd", oh_bt,
                                 h[:, c * LANES:(c + 1) * LANES, :], precision=hp)
    g = sums / jnp.maximum(counts, 1.0)
    g = jnp.maximum(jnp.einsum("tbd,dh->tbh", g, w_m1, precision=hp) + b_m1, 0.0)
    g = jnp.einsum("tbh,hk->tbk", g, w_m2, precision=hp) + b_m2
    return g[:, 0:N_GRAPHS_T, 0], edge


# --------------------------------- main ---------------------------------------
if __name__ == "__main__":
    key = jax.random.PRNGKey(0)
    ks = jax.random.split(key, 16)

    node_fts    = jax.random.normal(ks[0], (NUM_TILES, N_NODES_T, NUM_NODE_FTS), jnp.float32)
    automic_num = jax.random.randint(ks[1], (NUM_TILES, N_NODES_T), 0, NUM_ATOM_TYPES, jnp.int32)
    edge_fts    = jax.random.normal(ks[2], (NUM_TILES, N_EDGES_T, NUM_EDGE_FTS), jnp.float32)
    batch_idx   = jnp.tile(jnp.repeat(jnp.arange(N_GRAPHS_T, dtype=jnp.int32),
                                      N_NODES_T // N_GRAPHS_T)[None], (NUM_TILES, 1))

    def lin(k, fan_in, fan_out):
        kw, kb = jax.random.split(k)
        w = jax.random.normal(kw, (fan_in, fan_out), jnp.float32) / jnp.sqrt(fan_in)
        b = jax.random.normal(kb, (1, fan_out), jnp.float32) * 0.1
        return w, b

    w_edge, b_edge   = lin(ks[3], NUM_EDGE_FTS, EDGE_DIM)      # layer_first_edge
    emb              = jax.random.normal(ks[4], (NUM_ATOM_TYPES, ATOMIC_EMB),
                                         jnp.float32) * 0.1    # emb_automic
    w_node, b_node   = lin(ks[5], NUM_NODE_FTS, HID_DIM)       # layer_first_node
    w_first, b_first = lin(ks[6], D_TOTAL, D_TOTAL)            # layer_first
    w_last, b_last   = lin(ks[7], D_TOTAL, D_TOTAL)            # layer_last
    w_m1, b_m1       = lin(ks[8], D_TOTAL, MLP_HID)            # readout_MLP[0]
    w_m2, b_m2       = lin(ks[9], MLP_HID, 1)                  # readout_MLP[1]

    params = (w_edge, b_edge, emb, w_node, b_node, w_first, b_first,
              w_last, b_last, w_m1, b_m1, w_m2, b_m2)

    out, edge_proj = gad_forward(node_fts, automic_num, edge_fts, batch_idx, params)
    out = jax.block_until_ready(out)
    edge_proj = jax.block_until_ready(edge_proj)

    assert out.shape == (NUM_TILES, N_GRAPHS_T)
    assert edge_proj.shape == (NUM_TILES, N_EDGES_T, EDGE_DIM)

    # Tight check: kernel vs a pure-JAX mirror of the same math on the same bf16 slabs
    # (differences are only MXU vs XLA accumulation order / one bf16 ulp on the edge out).
    mir_out, mir_edge = gad_packed_reference(
        pack_data(node_fts, automic_num, edge_fts, batch_idx), pack_params(params))
    assert jnp.allclose(out, mir_out, rtol=2e-2, atol=2e-2)
    assert jnp.allclose(edge_proj, mir_edge, rtol=2e-2, atol=2e-2)

    # Semantic check: kernel vs the faithful f32 module forward; the tolerance reflects
    # the bf16 slab storage requested by the perf review (mean division is exact,
    # the approx reciprocal was removed).
    ref_out, ref_edge = jax.vmap(
        lambda n, a, e, b: gad_reference(n, a, e, b, params)
    )(node_fts, automic_num, edge_fts, batch_idx)
    assert jnp.allclose(out, ref_out, rtol=1e-1, atol=1e-1)
    assert jnp.allclose(edge_proj, ref_edge, rtol=1e-1, atol=1e-1)

    print("KERNEL_OK")
</pallas_src>

<mosaic_0001>
module attributes {stable_mosaic.version = 11 : i64} {
  func.func @gad_kernel(%arg0: i32, %arg1: memref<1x448x128xbf16, #tpu.memory_space<vmem>>, %arg2: memref<128x128xbf16, #tpu.memory_space<vmem>>, %arg3: memref<1x32x1xf32, #tpu.memory_space<vmem>>, %arg4: memref<1x128x128xbf16, #tpu.memory_space<vmem>>) attributes {dimension_semantics = [#tpu.dimension_semantics<parallel>], iteration_bounds = array<i64: 4>, scalar_prefetch = 0 : i64, scratch_operands = 0 : i64, tpu.core_type = #tpu.core_type<tc>, window_params = [{transform_indices = @transform_0, window_bounds = array<i64: 1, 448, 128>}, {pipeline_mode = #tpu.pipeline_mode<synchronous>, transform_indices = @transform_1, window_bounds = array<i64: 128, 128>}, {transform_indices = @transform_2, window_bounds = array<i64: 1, 32, 1>}, {transform_indices = @transform_3, window_bounds = array<i64: 1, 128, 128>}]} {
    %c0 = arith.constant 0 : index
    %c0_0 = arith.constant 0 : index
    %0 = vector.load %arg2[%c0, %c0_0] : memref<128x128xbf16, #tpu.memory_space<vmem>>, vector<32x32xbf16>
    %c32 = arith.constant 32 : index
    %c0_1 = arith.constant 0 : index
    %1 = vector.load %arg2[%c32, %c0_1] : memref<128x128xbf16, #tpu.memory_space<vmem>>, vector<1x32xbf16>
    %2 = arith.extf %1 : vector<1x32xbf16> to vector<1x32xf32>
    %c40 = arith.constant 40 : index
    %c0_2 = arith.constant 0 : index
    %3 = vector.load %arg2[%c40, %c0_2] : memref<128x128xbf16, #tpu.memory_space<vmem>>, vector<16x128xbf16>
    %c56 = arith.constant 56 : index
    %c0_3 = arith.constant 0 : index
    %4 = vector.load %arg2[%c56, %c0_3] : memref<128x128xbf16, #tpu.memory_space<vmem>>, vector<1x128xbf16>
    %5 = arith.extf %4 : vector<1x128xbf16> to vector<1x128xf32>
    %c64 = arith.constant 64 : index
    %c0_4 = arith.constant 0 : index
    %6 = vector.load %arg2[%c64, %c0_4] : memref<128x128xbf16, #tpu.memory_space<vmem>>, vector<32x16xbf16>
    %7 = arith.extf %6 : vector<32x16xbf16> to vector<32x16xf32>
    %c96 = arith.constant 96 : index
    %c0_5 = arith.constant 0 : index
    %8 = vector.load %arg2[%c96, %c0_5] : memref<128x128xbf16, #tpu.memory_space<vmem>>, vector<1x16xbf16>
    %9 = arith.extf %8 : vector<1x16xbf16> to vector<1x16xf32>
    %c104 = arith.constant 104 : index
    %c0_6 = arith.constant 0 : index
    %10 = vector.load %arg2[%c104, %c0_6] : memref<128x128xbf16, #tpu.memory_space<vmem>>, vector<16x128xbf16>
    %11 = arith.extf %10 : vector<16x128xbf16> to vector<16x128xf32>
    %c120 = arith.constant 120 : index
    %c0_7 = arith.constant 0 : index
    %12 = vector.load %arg2[%c120, %c0_7] : memref<128x128xbf16, #tpu.memory_space<vmem>>, vector<1x128xbf16>
    %13 = arith.extf %12 : vector<1x128xbf16> to vector<1x128xf32>
    %c0_8 = arith.constant 0 : index
    %c0_9 = arith.constant 0 : index
    %c0_10 = arith.constant 0 : index
    %14 = vector.load %arg1[%c0_8, %c0_9, %c0_10] : memref<1x448x128xbf16, #tpu.memory_space<vmem>>, vector<1x256x32xbf16>
    %15 = vector.shape_cast %14 : vector<1x256x32xbf16> to vector<256x32xbf16>
    %c0_11 = arith.constant 0 : index
    %c256 = arith.constant 256 : index
    %c0_12 = arith.constant 0 : index
    %16 = vector.load %arg1[%c0_11, %c256, %c0_12] : memref<1x448x128xbf16, #tpu.memory_space<vmem>>, vector<1x128x16xbf16>
    %17 = vector.shape_cast %16 : vector<1x128x16xbf16> to vector<128x16xbf16>
    %c0_13 = arith.constant 0 : index
    %c256_14 = arith.constant 256 : index
    %c64_15 = arith.constant 64 : index
    %18 = vector.load %arg1[%c0_13, %c256_14, %c64_15] : memref<1x448x128xbf16, #tpu.memory_space<vmem>>, vector<1x32x1xbf16>
    %19 = vector.shape_cast %18 : vector<1x32x1xbf16> to vector<32x1xbf16>
    %20 = arith.extf %19 : vector<32x1xbf16> to vector<32x1xf32>
    %cst = arith.constant dense<0.000000e+00> : vector<128x128xf32>
    %21 = tpu.matmul %17, %3, %cst {dimension_numbers = #tpu.dot_dimension_numbers<[1], [0], [0], [1], [0, 0, 1, 1], [], []>} : vector<128x16xbf16>, vector<16x128xbf16>, vector<128x128xf32> -> vector<128x128xf32>
    %22 = vector.broadcast %5 : vector<1x128xf32> to vector<128x128xf32>
    %23 = arith.addf %21, %22 : vector<128x128xf32>
    %24 = arith.truncf %23 : vector<128x128xf32> to vector<128x128xbf16>
    %c0_16 = arith.constant 0 : index
    %c0_17 = arith.constant 0 : index
    %c0_18 = arith.constant 0 : index
    %25 = vector.load %arg4[%c0_16, %c0_17, %c0_18] : memref<1x128x128xbf16, #tpu.memory_space<vmem>>, vector<1x128x128xbf16>
    %26 = vector.shape_cast %25 : vector<1x128x128xbf16> to vector<128x128xbf16>
    %27 = vector.shape_cast %24 : vector<128x128xbf16> to vector<1x128x128xbf16>
    tpu.vector_store %arg4[%c0_16, %c0_17, %c0_18], %27 {strides = array<i32>} : memref<1x128x128xbf16, #tpu.memory_space<vmem>>, vector<1x128x128xbf16>,
    %cst_19 = arith.constant dense<0.000000e+00> : vector<256x32xf32>
    %28 = tpu.matmul %15, %0, %cst_19 {dimension_numbers = #tpu.dot_dimension_numbers<[1], [0], [0], [1], [0, 0, 1, 1], [], []>} : vector<256x32xbf16>, vector<32x32xbf16>, vector<256x32xf32> -> vector<256x32xf32>
    %29 = vector.broadcast %2 : vector<1x32xf32> to vector<256x32xf32>
    %30 = arith.addf %28, %29 : vector<256x32xf32>
    %cst_20 = arith.constant 0.000000e+00 : f32
    %31 = vector.broadcast %cst_20 : f32 to vector<32x32xf32>
    %c0_21 = arith.constant 0 : index
    %c384 = arith.constant 384 : index
    %c0_22 = arith.constant 0 : index
    %32 = vector.load %arg1[%c0_21, %c384, %c0_22] : memref<1x448x128xbf16, #tpu.memory_space<vmem>>, vector<1x32x128xbf16>
    %33 = vector.shape_cast %32 : vector<1x32x128xbf16> to vector<32x128xbf16>
    %34 = arith.extf %33 : vector<32x128xbf16> to vector<32x128xf32>
    %35 = vector.extract_strided_slice %30 {offsets = [0, 0], sizes = [128, 32], strides = [1, 1]} : vector<256x32xf32> to vector<128x32xf32>
    %cst_23 = arith.constant dense<0.000000e+00> : vector<32x32xf32>
    %36 = tpu.matmul %34, %35, %cst_23 {dimension_numbers = #tpu.dot_dimension_numbers<[1], [0], [0], [1], [0, 0, 1, 1], [], []>} : vector<32x128xf32>, vector<128x32xf32>, vector<32x32xf32> -> vector<32x32xf32>
    %37 = arith.addf %31, %36 : vector<32x32xf32>
    %c0_24 = arith.constant 0 : index
    %c416 = arith.constant 416 : index
    %c0_25 = arith.constant 0 : index
    %38 = vector.load %arg1[%c0_24, %c416, %c0_25] : memref<1x448x128xbf16, #tpu.memory_space<vmem>>, vector<1x32x128xbf16>
    %39 = vector.shape_cast %38 : vector<1x32x128xbf16> to vector<32x128xbf16>
    %40 = arith.extf %39 : vector<32x128xbf16> to vector<32x128xf32>
    %41 = vector.extract_strided_slice %30 {offsets = [128, 0], sizes = [128, 32], strides = [1, 1]} : vector<256x32xf32> to vector<128x32xf32>
    %cst_26 = arith.constant dense<0.000000e+00> : vector<32x32xf32>
    %42 = tpu.matmul %40, %41, %cst_26 {dimension_numbers = #tpu.dot_dimension_numbers<[1], [0], [0], [1], [0, 0, 1, 1], [], []>} : vector<32x128xf32>, vector<128x32xf32>, vector<32x32xf32> -> vector<32x32xf32>
    %43 = arith.addf %37, %42 : vector<32x32xf32>
    %cst_27 = arith.constant 1.000000e+00 : f32
    %44 = vector.broadcast %cst_27 : f32 to vector<32x1xf32>
    %45 = arith.maximumf %20, %44 : vector<32x1xf32>
    %46 = vector.broadcast %45 : vector<32x1xf32> to vector<32x32xf32>
    %47 = arith.divf %43, %46 : vector<32x32xf32>
    %cst_28 = arith.constant dense<0.000000e+00> : vector<32x16xf32>
    %48 = tpu.matmul %47, %7, %cst_28 {dimension_numbers = #tpu.dot_dimension_numbers<[1], [0], [0], [1], [0, 0, 1, 1], [], []>} : vector<32x32xf32>, vector<32x16xf32>, vector<32x16xf32> -> vector<32x16xf32>
    %49 = vector.broadcast %9 : vector<1x16xf32> to vector<32x16xf32>
    %50 = arith.addf %48, %49 : vector<32x16xf32>
    %cst_29 = arith.constant 0.000000e+00 : f32
    %51 = vector.broadcast %cst_29 : f32 to vector<32x16xf32>
    %52 = arith.maximumf %50, %51 : vector<32x16xf32>
    %cst_30 = arith.constant dense<0.000000e+00> : vector<32x128xf32>
    %53 = tpu.matmul %52, %11, %cst_30 {dimension_numbers = #tpu.dot_dimension_numbers<[1], [0], [0], [1], [0, 0, 1, 1], [], []>} : vector<32x16xf32>, vector<16x128xf32>, vector<32x128xf32> -> vector<32x128xf32>
    %54 = vector.broadcast %13 : vector<1x128xf32> to vector<32x128xf32>
    %55 = arith.addf %53, %54 : vector<32x128xf32>
    %56 = vector.extract_strided_slice %55 {offsets = [0, 0], sizes = [32, 1], strides = [1, 1]} : vector<32x128xf32> to vector<32x1xf32>
    %c0_31 = arith.constant 0 : index
    %c0_32 = arith.constant 0 : index
    %c0_33 = arith.constant 0 : index
    %57 = vector.load %arg3[%c0_31, %c0_32, %c0_33] : memref<1x32x1xf32, #tpu.memory_space<vmem>>, vector<1x32x1xf32>
    %58 = vector.shape_cast %57 : vector<1x32x1xf32> to vector<32x1xf32>
    %59 = vector.shape_cast %56 : vector<32x1xf32> to vector<1x32x1xf32>
    tpu.vector_store %arg3[%c0_31, %c0_32, %c0_33], %59 {strides = array<i32>} : memref<1x32x1xf32, #tpu.memory_space<vmem>>, vector<1x32x1xf32>,
    return
  }
  func.func @transform_0(%arg0: i32) -> (i32, i32, i32) {
    %c0_i32 = arith.constant 0 : i32
    %c0_i32_0 = arith.constant 0 : i32
    %c0_i32_1 = arith.constant 0 : i32
    return %arg0, %c0_i32, %c0_i32_0 : i32, i32, i32
  }
  func.func @transform_1(%arg0: i32) -> (i32, i32) {
    %c0_i32 = arith.constant 0 : i32
    %c0_i32_0 = arith.constant 0 : i32
    %c0_i32_1 = arith.constant 0 : i32
    return %c0_i32, %c0_i32_0 : i32, i32
  }
  func.func @transform_2(%arg0: i32) -> (i32, i32, i32) {
    %c0_i32 = arith.constant 0 : i32
    %c0_i32_0 = arith.constant 0 : i32
    %c0_i32_1 = arith.constant 0 : i32
    return %arg0, %c0_i32, %c0_i32_0 : i32, i32, i32
  }
  func.func @transform_3(%arg0: i32) -> (i32, i32, i32) {
    %c0_i32 = arith.constant 0 : i32
    %c0_i32_0 = arith.constant 0 : i32
    %c0_i32_1 = arith.constant 0 : i32
    return %arg0, %c0_i32, %c0_i32_0 : i32, i32, i32
  }
}

</mosaic_0001>

<llo_original>
// kernel: gad_forward.1
$region0: #{gad_forward.1}
  #allocation0 [shape = 'u32[]', space=smem, size = 0x4, offset = 0x4, fixed_abs, tag = 'smem constant byte address 0x4 - core index']
  #allocation1 [shape = 'u32[144,128]{1,0:T(1,128)}', space=vmem, size = 0x12000, scoped, tag = 'internal scratch']
  %s0 = inlined_call_operand.vmem [shape: bf16[4,448,128], index: 0, kind: input, shape index: {}]
  %s1 = inlined_call_operand.vmem [shape: bf16[128,128], index: 1, kind: input, shape index: {}]
  %s2 = inlined_call_operand.vmem [shape: f32[4,32,1], index: 2, kind: output, shape index: {0}]
  %s3 = inlined_call_operand.vmem [shape: bf16[4,128,128], index: 3, kind: output, shape index: {1}]
  %4 = xla_tuple %s2, %s3
  %s5 = sld [smem:[#allocation0]]
  $region49: #{gad_forward.1} parent=0
    _
  %s7 = ssub.s32 1, %s5
  %s8 = scalar_select 0, %s7, %s5
  loop: start=0, step=1, limit=6
  $region2: #{gad_forward.1} parent=0 // loop_pre_header
    _
  $region3: #{gad_forward.1} parent=0 // loop_header
    %s10 = sphi 0, %s14
    %p11 = scmp.ge.s32.totalorder %s10, 6
    %s20 = sphi 0, %s22
    %s23 = sphi 0, %s20
    %s24 = sphi 0, %s23
    %s40 = sphi 0, %s24
    %s44 = sphi 0, %s44
    %s46 = sphi 0, %s44
    %s47 = sphi 0, %s46
    %s61 = sphi 0, %s47
    %s67 = sphi 0, %s69
    %s70 = sphi 0, %s67
    %s71 = sphi 0, %s70
    %s87 = sphi 0, %s71
    %s93 = sphi 0, %s95
    %s96 = sphi 0, %s93
    %s97 = sphi 0, %s96
    %s113 = sphi 0, %s97
  $region4: #{gad_forward.1} parent=0 // loop_header_branch
    %13 = sbr.rel (%p11) target = $region8
  $region5: #{gad_forward.1} parent=0 // loop_body
    %s15 = ssub.s32 %s10, 1
    %s16 = ssub.s32 %s10, 2
    %s17 = sadd.s32 %s10, 1
    %s18 = ssub.s32 %s10, %s17
    %p19 = scmp.eq.s32.totalorder %s18, 0
    %s21 = sadd.s32 %s20, 1
    %s22 = scalar_select %p19, %s20, %s21
    %p25 = pneg %p19
    %p26 = scmp.eq.s32.totalorder %s10, 3
    %p27 = por %p25, %p26
    %p28 = scmp.ne.s32.totalorder %s20, %s23
    %p29 = scmp.eq.s32.totalorder %s10, 0
    %p30 = por %p28, %p29
    %p31 = scmp.ne.s32.totalorder %s20, %s23
    %p32 = scmp.eq.s32.totalorder %s15, 3
    %p33 = por %p31, %p32
    %p34 = scmp.ne.s32.totalorder %s23, %s24
    %p35 = scmp.eq.s32.totalorder %s15, 0
    %p36 = por %p34, %p35
    %p37 = scmp.ne.s32.totalorder %s23, %s24
    %p38 = scmp.eq.s32.totalorder %s16, 3
    %p39 = por %p37, %p38
    %p41 = scmp.ne.s32.totalorder %s24, %s40
    %p42 = scmp.eq.s32.totalorder %s16, 0
    %p43 = por %p41, %p42
    %s45 = sadd.s32 %s44, 1
    %p48 = scmp.eq.s32.totalorder %s10, 3
    %p49 = scmp.ne.s32.totalorder %s44, %s46
    %p50 = scmp.eq.s32.totalorder %s10, 0
    %p51 = por %p49, %p50
    %p52 = scmp.ne.s32.totalorder %s44, %s46
    %p53 = scmp.eq.s32.totalorder %s15, 3
    %p54 = por %p52, %p53
    %p55 = scmp.ne.s32.totalorder %s46, %s47
    %p56 = scmp.eq.s32.totalorder %s15, 0
    %p57 = por %p55, %p56
    %p58 = scmp.ne.s32.totalorder %s46, %s47
    %p59 = scmp.eq.s32.totalorder %s16, 3
    %p60 = por %p58, %p59
    %p62 = scmp.ne.s32.totalorder %s47, %s61
    %p63 = scmp.eq.s32.totalorder %s16, 0
    %p64 = por %p62, %p63
    %s65 = ssub.s32 %s10, %s17
    %p66 = scmp.eq.s32.totalorder %s65, 0
    %s68 = sadd.s32 %s67, 1
    %s69 = scalar_select %p66, %s67, %s68
    %p72 = pneg %p66
    %p73 = scmp.eq.s32.totalorder %s10, 3
    %p74 = por %p72, %p73
    %p75 = scmp.ne.s32.totalorder %s67, %s70
    %p76 = scmp.eq.s32.totalorder %s10, 0
    %p77 = por %p75, %p76
    %p78 = scmp.ne.s32.totalorder %s67, %s70
    %p79 = scmp.eq.s32.totalorder %s15, 3
    %p80 = por %p78, %p79
    %p81 = scmp.ne.s32.totalorder %s70, %s71
    %p82 = scmp.eq.s32.totalorder %s15, 0
    %p83 = por %p81, %p82
    %p84 = scmp.ne.s32.totalorder %s70, %s71
    %p85 = scmp.eq.s32.totalorder %s16, 3
    %p86 = por %p84, %p85
    %p88 = scmp.ne.s32.totalorder %s71, %s87
    %p89 = scmp.eq.s32.totalorder %s16, 0
    %p90 = por %p88, %p89
    %s91 = ssub.s32 %s10, %s17
    %p92 = scmp.eq.s32.totalorder %s91, 0
    %s94 = sadd.s32 %s93, 1
    %s95 = scalar_select %p92, %s93, %s94
    %p98 = pneg %p92
    %p99 = scmp.eq.s32.totalorder %s10, 3
    %p100 = por %p98, %p99
    %p101 = scmp.ne.s32.totalorder %s93, %s96
    %p102 = scmp.eq.s32.totalorder %s10, 0
    %p103 = por %p101, %p102
    %p104 = scmp.ne.s32.totalorder %s93, %s96
    %p105 = scmp.eq.s32.totalorder %s15, 3
    %p106 = por %p104, %p105
    %p107 = scmp.ne.s32.totalorder %s96, %s97
    %p108 = scmp.eq.s32.totalorder %s15, 0
    %p109 = por %p107, %p108
    %p110 = scmp.ne.s32.totalorder %s96, %s97
    %p111 = scmp.eq.s32.totalorder %s16, 3
    %p112 = por %p110, %p111
    %p114 = scmp.ne.s32.totalorder %s97, %s113
    %p115 = scmp.eq.s32.totalorder %s16, 0
    %p116 = por %p114, %p115
    %p117 = scmp.le.s32.totalorder 1, %s10
    %p118 = scmp.lt.s32.totalorder %s10, 5
    %p119 = pnand %p117, %p118
    %p120 = pneg %p119
    // Predicated region
    $region9: #{gad_forward.1} parent=5 // pred_check
      _
    $region10: #{gad_forward.1} parent=5 // pred_check_branch
      %122 = sbr.rel (%p119) target = $region12
    $region11: #{gad_forward.1} parent=5 // pred_region
      %s123 = ssub.s32 %s10, 1
      // Predicated region
      $region13: #{gad_forward.1} parent=11 // pred_check
        %p124 = pneg %p57
      $region14: #{gad_forward.1} parent=11 // pred_check_branch
        %126 = sbr.rel (%p124) target = $region16
      $region15: #{gad_forward.1} parent=11 // pred_region
        _
      $region16: #{gad_forward.1} parent=11 // pred_fallthru
        _
    $region12: #{gad_forward.1} parent=5 // pred_fallthru
      _
    %p127 = scmp.lt.s32.totalorder %s10, 4
    // Predicated region
    $region17: #{gad_forward.1} parent=5 // pred_check
      %p128 = pneg %p127
    $region18: #{gad_forward.1} parent=5 // pred_check_branch
      %130 = sbr.rel (%p128) target = $region20
    $region19: #{gad_forward.1} parent=5 // pred_region
      // Predicated region
      $region21: #{gad_forward.1} parent=19 // pred_check
        %p131 = pneg %p30
      $region22: #{gad_forward.1} parent=19 // pred_check_branch
        %133 = sbr.rel (%p131) target = $region24
      $region23: #{gad_forward.1} parent=19 // pred_region
        %p134 = scmp.lt.s32.totalorder %s10, 3
        %s135 = scalar_select %p134, %s10, 3
        %s136 = smul.addr %s135, 56
        %s137 = smul.addr %s136, 4
        %s138 = scalar_lea.vmem %s0, %s137
      $region24: #{gad_forward.1} parent=19 // pred_fallthru
        _
    $region20: #{gad_forward.1} parent=5 // pred_fallthru
      _
    %p139 = scmp.le.s32.totalorder 1, %s10
    %p140 = scmp.lt.s32.totalorder %s10, 5
    %p141 = pnand %p139, %p140
    %p142 = pneg %p141
    // Predicated region
    $region25: #{gad_forward.1} parent=5 // pred_check
      _
    $region26: #{gad_forward.1} parent=5 // pred_check_branch
      %144 = sbr.rel (%p141) target = $region28
    $region27: #{gad_forward.1} parent=5 // pred_region
      %s145 = ssub.s32 %s10, 1
      %p146 = scmp.lt.s32.totalorder %s15, 3
      %s147 = scalar_select %p146, %s15, 3
      %s148 = smul.addr %s147, 56
      %s149 = smul.addr %s148, 4
      %s150 = scalar_lea.vmem %s0, %s149
      %p151 = pneg %p36
      %p152 = pneg %p33
      %p153 = pneg %p57
      %p154 = pneg %p54
      %p155 = pneg %p83
      %p156 = pneg %p80
      %p157 = scmp.lt.s32.totalorder %s15, 3
      %s158 = scalar_select %p157, %s15, 3
      %s159 = smul.addr %s158, 4
      %s160 = smul.addr %s159, 8
      %s161 = scalar_lea.vmem %s2, %s160
      %p162 = pneg %p109
      %p163 = pneg %p106
      %p164 = scmp.lt.s32.totalorder %s15, 3
      %s165 = scalar_select %p164, %s15, 3
      %s166 = smul.addr %s165, 16
      %s167 = smul.addr %s166, 4
      %s168 = scalar_lea.vmem %s3, %s167
      %p169 = scmp.lt.s32.totalorder %s15, 3
      %s170 = scalar_select %p169, %s15, 3
      %s171 = smul.addr %s170, 56
      %s172 = smul.addr %s171, 4
      %s173 = scalar_lea.vmem %s0, %s172
      %p174 = scmp.lt.s32.totalorder %s15, 3
      %s175 = scalar_select %p174, %s15, 3
      %s176 = smul.addr %s175, 4
      %s177 = smul.addr %s176, 8
      %s178 = scalar_lea.vmem %s2, %s177
      %p179 = scmp.lt.s32.totalorder %s15, 3
      %s180 = scalar_select %p179, %s15, 3
      %s181 = smul.addr %s180, 16
      %s182 = smul.addr %s181, 4
      %s183 = scalar_lea.vmem %s3, %s182
      %v185 = vld [vmem:[%s1] sm:$0xf]
      %v186 = vld [vmem:[%s1 + $0x4] sm:$0xf]
      %v187 = vld [vmem:[%s1 + $0x8] sm:$0xf]
      %v188 = vld [vmem:[%s1 + $0xc] sm:$0xf]
      %v189 = vld [vmem:[%s1 + $0x10] sm:$0x1]
      %v190 = vunpack.c.l.bf16 %v189
      %v191 = vld [vmem:[%s1 + $0x14] sm:$0xf]
      %v192 = vld [vmem:[%s1 + $0x18] sm:$0xf]
      %v193 = vld [vmem:[%s1 + $0x1c] sm:$0x1]
      %v194 = vunpack.c.l.bf16 %v193
      %v195 = vld [vmem:[%s1 + $0x20] sm:$0xf]
      %v196 = vld [vmem:[%s1 + $0x24] sm:$0xf]
      %v197 = vld [vmem:[%s1 + $0x28] sm:$0xf]
      %v198 = vld [vmem:[%s1 + $0x2c] sm:$0xf]
      %v199 = vunpack.c.l.bf16 %v195
      %v200 = vunpack.c.l.bf16 %v196
      %v201 = vunpack.c.l.bf16 %v197
      %v202 = vunpack.c.l.bf16 %v198
      %v203 = vld [vmem:[%s1 + $0x30] sm:$0x1]
      %v204 = vunpack.c.l.bf16 %v203
      %v205 = vld [vmem:[%s1 + $0x34] sm:$0xf]
      %v206 = vld [vmem:[%s1 + $0x38] sm:$0xf]
      %v207 = vunpack.c.l.bf16 %v205
      %v208 = vunpack.c.l.bf16 %v206
      %v209 = vld [vmem:[%s1 + $0x3c] sm:$0x1]
      %v210 = vunpack.c.l.bf16 %v209
      %v211 = vld [vmem:[%s173] sm:$0xf]
      %v212 = vld [vmem:[%s173 + $0x4] sm:$0xf]
      %v213 = vld [vmem:[%s173 + $0x8] sm:$0xf]
      %v214 = vld [vmem:[%s173 + $0xc] sm:$0xf]
      %v215 = vld [vmem:[%s173 + $0x10] sm:$0xf]
      %v216 = vld [vmem:[%s173 + $0x14] sm:$0xf]
      %v217 = vld [vmem:[%s173 + $0x18] sm:$0xf]
      %v218 = vld [vmem:[%s173 + $0x1c] sm:$0xf]
      %v219 = vld [vmem:[%s173 + $0x20] sm:$0xf]
      %v220 = vld [vmem:[%s173 + $0x24] sm:$0xf]
      %v221 = vld [vmem:[%s173 + $0x28] sm:$0xf]
      %v222 = vld [vmem:[%s173 + $0x2c] sm:$0xf]
      %v223 = vld [vmem:[%s173 + $0x30] sm:$0xf]
      %v224 = vld [vmem:[%s173 + $0x34] sm:$0xf]
      %v225 = vld [vmem:[%s173 + $0x38] sm:$0xf]
      %v226 = vld [vmem:[%s173 + $0x3c] sm:$0xf]
      %v227 = vld [vmem:[%s173 + $0x40] sm:$0xf]
      %v228 = vld [vmem:[%s173 + $0x44] sm:$0xf]
      %v229 = vld [vmem:[%s173 + $0x48] sm:$0xf]
      %v230 = vld [vmem:[%s173 + $0x4c] sm:$0xf]
      %v231 = vld [vmem:[%s173 + $0x50] sm:$0xf]
      %v232 = vld [vmem:[%s173 + $0x54] sm:$0xf]
      %v233 = vld [vmem:[%s173 + $0x58] sm:$0xf]
      %v234 = vld [vmem:[%s173 + $0x5c] sm:$0xf]
      %v235 = vld [vmem:[%s173 + $0x60] sm:$0xf]
      %v236 = vld [vmem:[%s173 + $0x64] sm:$0xf]
      %v237 = vld [vmem:[%s173 + $0x68] sm:$0xf]
      %v238 = vld [vmem:[%s173 + $0x6c] sm:$0xf]
      %v239 = vld [vmem:[%s173 + $0x70] sm:$0xf]
      %v240 = vld [vmem:[%s173 + $0x74] sm:$0xf]
      %v241 = vld [vmem:[%s173 + $0x78] sm:$0xf]
      %v242 = vld [vmem:[%s173 + $0x7c] sm:$0xf]
      %v243 = vld [vmem:[%s173 + $0x80] sm:$0xf]
      %v244 = vld [vmem:[%s173 + $0x84] sm:$0xf]
      %v245 = vld [vmem:[%s173 + $0x88] sm:$0xf]
      %v246 = vld [vmem:[%s173 + $0x8c] sm:$0xf]
      %v247 = vld [vmem:[%s173 + $0x90] sm:$0xf]
      %v248 = vld [vmem:[%s173 + $0x94] sm:$0xf]
      %v249 = vld [vmem:[%s173 + $0x98] sm:$0xf]
      %v250 = vld [vmem:[%s173 + $0x9c] sm:$0xf]
      %v251 = vld [vmem:[%s173 + $0xa0] sm:$0xf]
      %v252 = vld [vmem:[%s173 + $0xa4] sm:$0xf]
      %v253 = vld [vmem:[%s173 + $0xa8] sm:$0xf]
      %v254 = vld [vmem:[%s173 + $0xac] sm:$0xf]
      %v255 = vld [vmem:[%s173 + $0xb0] sm:$0xf]
      %v256 = vld [vmem:[%s173 + $0xb4] sm:$0xf]
      %v257 = vld [vmem:[%s173 + $0xb8] sm:$0xf]
      %v258 = vld [vmem:[%s173 + $0xbc] sm:$0xf]
      %v259 = vunpack.c.l.bf16 %v243
      %v260 = vunpack.c.l.bf16 %v244
      %v261 = vunpack.c.l.bf16 %v245
      %v262 = vunpack.c.l.bf16 %v246
      %v263 = vlaneseq
      %v264 = vshrl.u32 %v263, 7
      %v265 = vsub.s32 0, %v264
      %v266 = vrot.slane %v194, %v265
      %v283 = vunpack.c.l.b16 %v243
      %v284 = vunpack.c.l.b16 %v244
      %v285 = vunpack.c.l.b16 %v245
      %v286 = vunpack.c.l.b16 %v246
      %v287 = vunpack.c.l.b16 %v247
      %v288 = vunpack.c.l.b16 %v248
      %v289 = vunpack.c.l.b16 %v249
      %v290 = vunpack.c.l.b16 %v250
      %v291 = vunpack.c.l.b16 %v251
      %v292 = vunpack.c.l.b16 %v252
      %v293 = vunpack.c.l.b16 %v253
      %v294 = vunpack.c.l.b16 %v254
      %v295 = vunpack.c.l.b16 %v255
      %v296 = vunpack.c.l.b16 %v256
      %v297 = vunpack.c.l.b16 %v257
      %v298 = vunpack.c.l.b16 %v258
      %v299 = vpack.c.b16 %v284, %v283
      %v300 = vpack.c.b16 %v286, %v285
      %v301 = vpack.c.b16 %v288, %v287
      %v302 = vpack.c.b16 %v290, %v289
      %v303 = vpack.c.b16 %v292, %v291
      %v304 = vpack.c.b16 %v294, %v293
      %v305 = vpack.c.b16 %v296, %v295
      %v306 = vpack.c.b16 %v298, %v297
      %v309 = vunpack.c.l.b16 %v191
      %v310 = vunpack.c.l.b16 %v192
      %v311 = vpack.c.b16 %v310, %v309
      %vm313 = vcmask 130048
      %v315 = vsel %vm313, %v299, 0
      %v318 = vsel %vm313, %v300, 0
      %v321 = vsel %vm313, %v301, 0
      %v324 = vsel %vm313, %v302, 0
      %v327 = vsel %vm313, %v303, 0
      %v330 = vsel %vm313, %v304, 0
      %v333 = vsel %vm313, %v305, 0
      %v336 = vsel %vm313, %v306, 0
      %338 = vmatprep.subr.bf16.mxu0 0
      %339 = vmatpush1.bf16.msra.mxu0 %v311
      %340 = vmatprep.subr.bf16.mxu0 0
      %341 = vmatpush1.bf16.msra.mxu0 0
      %342 = vmatprep.subr.bf16.mxu0 0
      %343 = vmatpush1.bf16.msra.mxu0 0
      %344 = vmatprep.subr.bf16.mxu0 0
      %345 = vmatpush1.bf16.msra.mxu0 0
      %346 = vmatprep.subr.bf16.mxu0 0
      %347 = vmatpush1.bf16.msra.mxu0 0
      %348 = vmatprep.subr.bf16.mxu0 0
      %349 = vmatpush1.bf16.msra.mxu0 0
      %350 = vmatprep.subr.bf16.mxu0 0
      %351 = vmatpush1.bf16.msra.mxu0 0
      %352 = vmatprep.subr.bf16.mxu0 0
      %353 = vmatpush1.bf16.msra.mxu0 0
      %354 = vmatprep.subr.bf16.mxu0 0
      %355 = vmatpush1.bf16.msra.mxu0 0
      %356 = vmatprep.subr.bf16.mxu0 0
      %357 = vmatpush1.bf16.msra.mxu0 0
      %358 = vmatprep.subr.bf16.mxu0 0
      %359 = vmatpush1.bf16.msra.mxu0 0
      %360 = vmatprep.subr.bf16.mxu0 0
      %361 = vmatpush1.bf16.msra.mxu0 0
      %362 = vmatprep.subr.bf16.mxu0 0
      %363 = vmatpush1.bf16.msra.mxu0 0
      %364 = vmatprep.subr.bf16.mxu0 0
      %365 = vmatpush1.bf16.msra.mxu0 0
      %366 = vmatprep.subr.bf16.mxu0 0
      %367 = vmatpush1.bf16.msra.mxu0 0
      %368 = vmatprep.subr.bf16.mxu0 0
      %369 = vmatpush1.bf16.msra.mxu0 0
      %370 = vmatprep.mubr.bf16.mxu0 0
      %371 = vmatmul.mubr.bf16.gmra.mrb[0].mxu0 %v315
      %v372 = vpop.f32.mrb[0].mxu0
      %v373 = vadd.f32 %v266, %v372
      %v374 = vpop.f32.mrb[0].mxu0
      %v375 = vpop.f32.mrb[0].mxu0
      %v376 = vadd.f32 %v266, %v375
      %v377 = vpop.f32.mrb[0].mxu0
      %378 = vmatprep.mubr.bf16.mxu0 0
      %379 = vmatmul.mubr.bf16.gmra.mrb[0].mxu0 %v318
      %v380 = vpop.f32.mrb[0].mxu0
      %v381 = vadd.f32 %v266, %v380
      %v382 = vpop.f32.mrb[0].mxu0
      %v383 = vpop.f32.mrb[0].mxu0
      %v384 = vadd.f32 %v266, %v383
      %v385 = vpop.f32.mrb[0].mxu0
      %386 = vmatprep.mubr.bf16.mxu0 0
      %387 = vmatmul.mubr.bf16.gmra.mrb[0].mxu0 %v321
      %v388 = vpop.f32.mrb[0].mxu0
      %v389 = vadd.f32 %v266, %v388
      %v390 = vpop.f32.mrb[0].mxu0
      %v391 = vpop.f32.mrb[0].mxu0
      %v392 = vadd.f32 %v266, %v391
      %v393 = vpop.f32.mrb[0].mxu0
      %394 = vmatprep.mubr.bf16.mxu0 0
      %395 = vmatmul.mubr.bf16.gmra.mrb[0].mxu0 %v324
      %v396 = vpop.f32.mrb[0].mxu0
      %v397 = vadd.f32 %v266, %v396
      %v398 = vpop.f32.mrb[0].mxu0
      %v399 = vpop.f32.mrb[0].mxu0
      %v400 = vadd.f32 %v266, %v399
      %v401 = vpop.f32.mrb[0].mxu0
      %402 = vmatprep.mubr.bf16.mxu0 0
      %403 = vmatmul.mubr.bf16.gmra.mrb[0].mxu0 %v327
      %v404 = vpop.f32.mrb[0].mxu0
      %v405 = vadd.f32 %v266, %v404
      %v406 = vpop.f32.mrb[0].mxu0
      %v407 = vpop.f32.mrb[0].mxu0
      %v408 = vadd.f32 %v266, %v407
      %v409 = vpop.f32.mrb[0].mxu0
      %410 = vmatprep.mubr.bf16.mxu0 0
      %411 = vmatmul.mubr.bf16.gmra.mrb[0].mxu0 %v330
      %v412 = vpop.f32.mrb[0].mxu0
      %v413 = vadd.f32 %v266, %v412
      %v414 = vpop.f32.mrb[0].mxu0
      %v415 = vpop.f32.mrb[0].mxu0
      %v416 = vadd.f32 %v266, %v415
      %v417 = vpop.f32.mrb[0].mxu0
      %418 = vmatprep.mubr.bf16.mxu0 0
      %419 = vmatmul.mubr.bf16.gmra.mrb[0].mxu0 %v333
      %v420 = vpop.f32.mrb[0].mxu0
      %v421 = vadd.f32 %v266, %v420
      %v422 = vpop.f32.mrb[0].mxu0
      %v423 = vpop.f32.mrb[0].mxu0
      %v424 = vadd.f32 %v266, %v423
      %v425 = vpop.f32.mrb[0].mxu0
      %426 = vmatprep.mubr.bf16.mxu0 0
      %427 = vmatmul.mubr.bf16.gmra.mrb[0].mxu0 %v336
      %v428 = vpop.f32.mrb[0].mxu0
      %v429 = vadd.f32 %v266, %v428
      %v430 = vpop.f32.mrb[0].mxu0
      %v431 = vpop.f32.mrb[0].mxu0
      %v432 = vadd.f32 %v266, %v431
      %v433 = vpop.f32.mrb[0].mxu0
      %434 = vdwg.mxu0
      %v435 = vpack.c.bf16 %v376, %v373
      %v436 = vpack.c.bf16 %v384, %v381
      %v437 = vpack.c.bf16 %v392, %v389
      %v438 = vpack.c.bf16 %v400, %v397
      %v439 = vpack.c.bf16 %v408, %v405
      %v440 = vpack.c.bf16 %v416, %v413
      %v441 = vpack.c.bf16 %v424, %v421
      %v442 = vpack.c.bf16 %v432, %v429
      %v451 = vunpack.c.l.b16 %v435
      %v452 = vunpack.c.h.b16 %v435
      %v453 = vunpack.c.l.b16 %v436
      %v454 = vunpack.c.h.b16 %v436
      %v455 = vunpack.c.l.b16 %v437
      %v456 = vunpack.c.h.b16 %v437
      %v457 = vunpack.c.l.b16 %v438
      %v458 = vunpack.c.h.b16 %v438
      %v459 = vunpack.c.l.b16 %v439
      %v460 = vunpack.c.h.b16 %v439
      %v461 = vunpack.c.l.b16 %v440
      %v462 = vunpack.c.h.b16 %v440
      %v463 = vunpack.c.l.b16 %v441
      %v464 = vunpack.c.h.b16 %v441
      %v465 = vunpack.c.l.b16 %v442
      %v466 = vunpack.c.h.b16 %v442
      %v467 = vpack.c.b16 %v451, %v451
      %v468 = vpack.c.b16 %v452, %v452
      %v469 = vpack.c.b16 %v453, %v453
      %v470 = vpack.c.b16 %v454, %v454
      %v471 = vpack.c.b16 %v455, %v455
      %v472 = vpack.c.b16 %v456, %v456
      %v473 = vpack.c.b16 %v457, %v457
      %v474 = vpack.c.b16 %v458, %v458
      %v475 = vpack.c.b16 %v459, %v459
      %v476 = vpack.c.b16 %v460, %v460
      %v477 = vpack.c.b16 %v461, %v461
      %v478 = vpack.c.b16 %v462, %v462
      %v479 = vpack.c.b16 %v463, %v463
      %v480 = vpack.c.b16 %v464, %v464
      %v481 = vpack.c.b16 %v465, %v465
      %v482 = vpack.c.b16 %v466, %v466
      %499 = vst [vmem:[%s183] sm:$0xf] %v467
      %500 = vst [vmem:[%s183 + $0x4] sm:$0xf] %v468
      %501 = vst [vmem:[%s183 + $0x8] sm:$0xf] %v469
      %502 = vst [vmem:[%s183 + $0xc] sm:$0xf] %v470
      %503 = vst [vmem:[%s183 + $0x10] sm:$0xf] %v471
      %504 = vst [vmem:[%s183 + $0x14] sm:$0xf] %v472
      %505 = vst [vmem:[%s183 + $0x18] sm:$0xf] %v473
      %506 = vst [vmem:[%s183 + $0x1c] sm:$0xf] %v474
      %507 = vst [vmem:[%s183 + $0x20] sm:$0xf] %v475
      %508 = vst [vmem:[%s183 + $0x24] sm:$0xf] %v476
      %509 = vst [vmem:[%s183 + $0x28] sm:$0xf] %v477
      %510 = vst [vmem:[%s183 + $0x2c] sm:$0xf] %v478
      %511 = vst [vmem:[%s183 + $0x30] sm:$0xf] %v479
      %512 = vst [vmem:[%s183 + $0x34] sm:$0xf] %v480
      %513 = vst [vmem:[%s183 + $0x38] sm:$0xf] %v481
      %514 = vst [vmem:[%s183 + $0x3c] sm:$0xf] %v482
      %v515 = vlaneseq
      %v516 = vshrl.u32 %v515, 7
      %v517 = vsub.s32 0, %v516
      %v518 = vrot.slane %v190, %v517
      %v551 = vunpack.c.l.b16 %v211
      %v552 = vunpack.c.l.b16 %v212
      %v553 = vunpack.c.l.b16 %v213
      %v554 = vunpack.c.l.b16 %v214
      %v555 = vunpack.c.l.b16 %v215
      %v556 = vunpack.c.l.b16 %v216
      %v557 = vunpack.c.l.b16 %v217
      %v558 = vunpack.c.l.b16 %v218
      %v559 = vunpack.c.l.b16 %v219
      %v560 = vunpack.c.l.b16 %v220
      %v561 = vunpack.c.l.b16 %v221
      %v562 = vunpack.c.l.b16 %v222
      %v563 = vunpack.c.l.b16 %v223
      %v564 = vunpack.c.l.b16 %v224
      %v565 = vunpack.c.l.b16 %v225
      %v566 = vunpack.c.l.b16 %v226
      %v567 = vunpack.c.l.b16 %v227
      %v568 = vunpack.c.l.b16 %v228
      %v569 = vunpack.c.l.b16 %v229
      %v570 = vunpack.c.l.b16 %v230
      %v571 = vunpack.c.l.b16 %v231
      %v572 = vunpack.c.l.b16 %v232
      %v573 = vunpack.c.l.b16 %v233
      %v574 = vunpack.c.l.b16 %v234
      %v575 = vunpack.c.l.b16 %v235
      %v576 = vunpack.c.l.b16 %v236
      %v577 = vunpack.c.l.b16 %v237
      %v578 = vunpack.c.l.b16 %v238
      %v579 = vunpack.c.l.b16 %v239
      %v580 = vunpack.c.l.b16 %v240
      %v581 = vunpack.c.l.b16 %v241
      %v582 = vunpack.c.l.b16 %v242
      %v583 = vpack.c.b16 %v552, %v551
      %v584 = vpack.c.b16 %v554, %v553
      %v585 = vpack.c.b16 %v556, %v555
      %v586 = vpack.c.b16 %v558, %v557
      %v587 = vpack.c.b16 %v560, %v559
      %v588 = vpack.c.b16 %v562, %v561
      %v589 = vpack.c.b16 %v564, %v563
      %v590 = vpack.c.b16 %v566, %v565
      %v591 = vpack.c.b16 %v568, %v567
      %v592 = vpack.c.b16 %v570, %v569
      %v593 = vpack.c.b16 %v572, %v571
      %v594 = vpack.c.b16 %v574, %v573
      %v595 = vpack.c.b16 %v576, %v575
      %v596 = vpack.c.b16 %v578, %v577
      %v597 = vpack.c.b16 %v580, %v579
      %v598 = vpack.c.b16 %v582, %v581
      %v603 = vunpack.c.l.b16 %v185
      %v604 = vunpack.c.l.b16 %v186
      %v605 = vunpack.c.l.b16 %v187
      %v606 = vunpack.c.l.b16 %v188
      %v607 = vpack.c.b16 %v604, %v603
      %v608 = vpack.c.b16 %v606, %v605
      %vm611 = vcmask 261120
      %v613 = vsel %vm611, %v583, 0
      %v616 = vsel %vm611, %v584, 0
      %v619 = vsel %vm611, %v585, 0
      %v622 = vsel %vm611, %v586, 0
      %v625 = vsel %vm611, %v587, 0
      %v628 = vsel %vm611, %v588, 0
      %v631 = vsel %vm611, %v589, 0
      %v634 = vsel %vm611, %v590, 0
      %v637 = vsel %vm611, %v591, 0
      %v640 = vsel %vm611, %v592, 0
      %v643 = vsel %vm611, %v593, 0
      %v646 = vsel %vm611, %v594, 0
      %v649 = vsel %vm611, %v595, 0
      %v652 = vsel %vm611, %v596, 0
      %v655 = vsel %vm611, %v597, 0
      %v658 = vsel %vm611, %v598, 0
      %660 = vmatprep.subr.bf16.mxu0 0
      %661 = vmatpush1.bf16.msra.mxu0 %v607
      %662 = vmatprep.subr.bf16.mxu0 0
      %663 = vmatpush1.bf16.msra.mxu0 %v608
      %664 = vmatprep.subr.bf16.mxu0 0
      %665 = vmatpush1.bf16.msra.mxu0 0
      %666 = vmatprep.subr.bf16.mxu0 0
      %667 = vmatpush1.bf16.msra.mxu0 0
      %668 = vmatprep.subr.bf16.mxu0 0
      %669 = vmatpush1.bf16.msra.mxu0 0
      %670 = vmatprep.subr.bf16.mxu0 0
      %671 = vmatpush1.bf16.msra.mxu0 0
      %672 = vmatprep.subr.bf16.mxu0 0
      %673 = vmatpush1.bf16.msra.mxu0 0
      %674 = vmatprep.subr.bf16.mxu0 0
      %675 = vmatpush1.bf16.msra.mxu0 0
      %676 = vmatprep.subr.bf16.mxu0 0
      %677 = vmatpush1.bf16.msra.mxu0 0
      %678 = vmatprep.subr.bf16.mxu0 0
      %679 = vmatpush1.bf16.msra.mxu0 0
      %680 = vmatprep.subr.bf16.mxu0 0
      %681 = vmatpush1.bf16.msra.mxu0 0
      %682 = vmatprep.subr.bf16.mxu0 0
      %683 = vmatpush1.bf16.msra.mxu0 0
      %684 = vmatprep.subr.bf16.mxu0 0
      %685 = vmatpush1.bf16.msra.mxu0 0
      %686 = vmatprep.subr.bf16.mxu0 0
      %687 = vmatpush1.bf16.msra.mxu0 0
      %688 = vmatprep.subr.bf16.mxu0 0
      %689 = vmatpush1.bf16.msra.mxu0 0
      %690 = vmatprep.subr.bf16.mxu0 0
      %691 = vmatpush1.bf16.msra.mxu0 0
      %692 = vmatprep.mubr.bf16.mxu0 0
      %693 = vmatmul.mubr.bf16.gmra.mrb[0].mxu0 %v613
      %v694 = vpop.f32.mrb[0].mxu0
      %v695 = vadd.f32 %v518, %v694
      %v696 = vpop.f32.mrb[0].mxu0
      %v697 = vpop.f32.mrb[0].mxu0
      %v698 = vadd.f32 %v518, %v697
      %v699 = vpop.f32.mrb[0].mxu0
      %700 = vmatprep.mubr.bf16.mxu0 0
      %701 = vmatmul.mubr.bf16.gmra.mrb[0].mxu0 %v616
      %v702 = vpop.f32.mrb[0].mxu0
      %v703 = vadd.f32 %v518, %v702
      %v704 = vpop.f32.mrb[0].mxu0
      %v705 = vpop.f32.mrb[0].mxu0
      %v706 = vadd.f32 %v518, %v705
      %v707 = vpop.f32.mrb[0].mxu0
      %708 = vmatprep.mubr.bf16.mxu0 0
      %709 = vmatmul.mubr.bf16.gmra.mrb[0].mxu0 %v619
      %v710 = vpop.f32.mrb[0].mxu0
      %v711 = vadd.f32 %v518, %v710
      %v712 = vpop.f32.mrb[0].mxu0
      %v713 = vpop.f32.mrb[0].mxu0
      %v714 = vadd.f32 %v518, %v713
      %v715 = vpop.f32.mrb[0].mxu0
      %716 = vmatprep.mubr.bf16.mxu0 0
      %717 = vmatmul.mubr.bf16.gmra.mrb[0].mxu0 %v622
      %v718 = vpop.f32.mrb[0].mxu0
      %v719 = vadd.f32 %v518, %v718
      %v720 = vpop.f32.mrb[0].mxu0
      %v721 = vpop.f32.mrb[0].mxu0
      %v722 = vadd.f32 %v518, %v721
      %v723 = vpop.f32.mrb[0].mxu0
      %724 = vmatprep.mubr.bf16.mxu0 0
      %725 = vmatmul.mubr.bf16.gmra.mrb[0].mxu0 %v625
      %v726 = vpop.f32.mrb[0].mxu0
      %v727 = vadd.f32 %v518, %v726
      %v728 = vpop.f32.mrb[0].mxu0
      %v729 = vpop.f32.mrb[0].mxu0
      %v730 = vadd.f32 %v518, %v729
      %v731 = vpop.f32.mrb[0].mxu0
      %732 = vmatprep.mubr.bf16.mxu0 0
      %733 = vmatmul.mubr.bf16.gmra.mrb[0].mxu0 %v628
      %v734 = vpop.f32.mrb[0].mxu0
      %v735 = vadd.f32 %v518, %v734
      %v736 = vpop.f32.mrb[0].mxu0
      %v737 = vpop.f32.mrb[0].mxu0
      %v738 = vadd.f32 %v518, %v737
      %v739 = vpop.f32.mrb[0].mxu0
      %740 = vmatprep.mubr.bf16.mxu0 0
      %741 = vmatmul.mubr.bf16.gmra.mrb[0].mxu0 %v631
      %v742 = vpop.f32.mrb[0].mxu0
      %v743 = vadd.f32 %v518, %v742
      %v744 = vpop.f32.mrb[0].mxu0
      %v745 = vpop.f32.mrb[0].mxu0
      %v746 = vadd.f32 %v518, %v745
      %v747 = vpop.f32.mrb[0].mxu0
      %748 = vmatprep.mubr.bf16.mxu0 0
      %749 = vmatmul.mubr.bf16.gmra.mrb[0].mxu0 %v634
      %v750 = vpop.f32.mrb[0].mxu0
      %v751 = vadd.f32 %v518, %v750
      %v752 = vpop.f32.mrb[0].mxu0
      %v753 = vpop.f32.mrb[0].mxu0
      %v754 = vadd.f32 %v518, %v753
      %v755 = vpop.f32.mrb[0].mxu0
      %756 = vmatprep.mubr.bf16.mxu0 0
      %757 = vmatmul.mubr.bf16.gmra.mrb[0].mxu0 %v637
      %v758 = vpop.f32.mrb[0].mxu0
      %v759 = vadd.f32 %v518, %v758
      %v760 = vpop.f32.mrb[0].mxu0
      %v761 = vpop.f32.mrb[0].mxu0
      %v762 = vadd.f32 %v518, %v761
      %v763 = vpop.f32.mrb[0].mxu0
      %764 = vmatprep.mubr.bf16.mxu0 0
      %765 = vmatmul.mubr.bf16.gmra.mrb[0].mxu0 %v640
      %v766 = vpop.f32.mrb[0].mxu0
      %v767 = vadd.f32 %v518, %v766
      %v768 = vpop.f32.mrb[0].mxu0
      %v769 = vpop.f32.mrb[0].mxu0
      %v770 = vadd.f32 %v518, %v769
      %v771 = vpop.f32.mrb[0].mxu0
      %772 = vmatprep.mubr.bf16.mxu0 0
      %773 = vmatmul.mubr.bf16.gmra.mrb[0].mxu0 %v643
      %v774 = vpop.f32.mrb[0].mxu0
      %v775 = vadd.f32 %v518, %v774
      %v776 = vpop.f32.mrb[0].mxu0
      %v777 = vpop.f32.mrb[0].mxu0
      %v778 = vadd.f32 %v518, %v777
      %v779 = vpop.f32.mrb[0].mxu0
      %780 = vmatprep.mubr.bf16.mxu0 0
      %781 = vmatmul.mubr.bf16.gmra.mrb[0].mxu0 %v646
      %v782 = vpop.f32.mrb[0].mxu0
      %v783 = vadd.f32 %v518, %v782
      %v784 = vpop.f32.mrb[0].mxu0
      %v785 = vpop.f32.mrb[0].mxu0
      %v786 = vadd.f32 %v518, %v785
      %v787 = vpop.f32.mrb[0].mxu0
      %788 = vmatprep.mubr.bf16.mxu0 0
      %789 = vmatmul.mubr.bf16.gmra.mrb[0].mxu0 %v649
      %v790 = vpop.f32.mrb[0].mxu0
      %v791 = vadd.f32 %v518, %v790
      %v792 = vpop.f32.mrb[0].mxu0
      %v793 = vpop.f32.mrb[0].mxu0
      %v794 = vadd.f32 %v518, %v793
      %v795 = vpop.f32.mrb[0].mxu0
      %796 = vmatprep.mubr.bf16.mxu0 0
      %797 = vmatmul.mubr.bf16.gmra.mrb[0].mxu0 %v652
      %v798 = vpop.f32.mrb[0].mxu0
      %v799 = vadd.f32 %v518, %v798
      %v800 = vpop.f32.mrb[0].mxu0
      %v801 = vpop.f32.mrb[0].mxu0
      %v802 = vadd.f32 %v518, %v801
      %v803 = vpop.f32.mrb[0].mxu0
      %804 = vmatprep.mubr.bf16.mxu0 0
      %805 = vmatmul.mubr.bf16.gmra.mrb[0].mxu0 %v655
      %v806 = vpop.f32.mrb[0].mxu0
      %v807 = vadd.f32 %v518, %v806
      %v808 = vpop.f32.mrb[0].mxu0
      %v809 = vpop.f32.mrb[0].mxu0
      %v810 = vadd.f32 %v518, %v809
      %v811 = vpop.f32.mrb[0].mxu0
      %812 = vmatprep.mubr.bf16.mxu0 0
      %813 = vmatmul.mubr.bf16.gmra.mrb[0].mxu0 %v658
      %v814 = vpop.f32.mrb[0].mxu0
      %v815 = vadd.f32 %v518, %v814
      %v816 = vpop.f32.mrb[0].mxu0
      %v817 = vpop.f32.mrb[0].mxu0
      %v818 = vadd.f32 %v518, %v817
      %v819 = vpop.f32.mrb[0].mxu0
      %820 = vdwg.mxu0
      %v821 = vld [vmem:[%s173 + $0xc0] sm:$0xf]
      %v822 = vld [vmem:[%s173 + $0xc4] sm:$0xf]
      %v823 = vld [vmem:[%s173 + $0xc8] sm:$0xf]
      %v824 = vld [vmem:[%s173 + $0xcc] sm:$0xf]
      %v825 = vunpack.c.l.bf16 %v821
      %v826 = vunpack.c.l.bf16 %v822
      %v827 = vunpack.c.l.bf16 %v823
      %v828 = vunpack.c.l.bf16 %v824
      %v829 = vld [vmem:[%s173 + $0xd0] sm:$0xf]
      %v830 = vld [vmem:[%s173 + $0xd4] sm:$0xf]
      %v831 = vld [vmem:[%s173 + $0xd8] sm:$0xf]
      %v832 = vld [vmem:[%s173 + $0xdc] sm:$0xf]
      %v833 = vunpack.c.l.bf16 %v829
      %v834 = vunpack.c.l.bf16 %v830
      %v835 = vunpack.c.l.bf16 %v831
      %v836 = vunpack.c.l.bf16 %v832
      %837 = vmatprep.subr.mxu0 0.0
      %838 = vmatpush1.msra.mxu0 %v759
      %839 = vmatprep.subr.mxu0 0.0
      %840 = vmatpush1.msra.mxu0 %v762
      %841 = vmatprep.subr.mxu0 0.0
      %842 = vmatpush1.msra.mxu0 %v767
      %843 = vmatprep.subr.mxu0 0.0
      %844 = vmatpush1.msra.mxu0 %v770
      %845 = vmatprep.subr.mxu0 0.0
      %846 = vmatpush1.msra.mxu0 %v775
      %847 = vmatprep.subr.mxu0 0.0
      %848 = vmatpush1.msra.mxu0 %v778
      %849 = vmatprep.subr.mxu0 0.0
      %850 = vmatpush1.msra.mxu0 %v783
      %851 = vmatprep.subr.mxu0 0.0
      %852 = vmatpush1.msra.mxu0 %v786
      %853 = vmatprep.subr.mxu0 0.0
      %854 = vmatpush1.msra.mxu0 %v791
      %855 = vmatprep.subr.mxu0 0.0
      %856 = vmatpush1.msra.mxu0 %v794
      %857 = vmatprep.subr.mxu0 0.0
      %858 = vmatpush1.msra.mxu0 %v799
      %859 = vmatprep.subr.mxu0 0.0
      %860 = vmatpush1.msra.mxu0 %v802
      %861 = vmatprep.subr.mxu0 0.0
      %862 = vmatpush1.msra.mxu0 %v807
      %863 = vmatprep.subr.mxu0 0.0
      %864 = vmatpush1.msra.mxu0 %v810
      %865 = vmatprep.subr.mxu0 0.0
      %866 = vmatpush1.msra.mxu0 %v815
      %867 = vmatprep.subr.mxu0 0.0
      %868 = vmatpush1.msra.mxu0 %v818
      %869 = vmatprep.subr.mxu0 0.0
      %870 = vmatpush1.msra.mxu0 0.0
      %871 = vmatprep.subr.mxu0 0.0
      %872 = vmatpush1.msra.mxu0 0.0
      %873 = vmatprep.subr.mxu0 0.0
      %874 = vmatpush1.msra.mxu0 0.0
      %875 = vmatprep.subr.mxu0 0.0
      %876 = vmatpush1.msra.mxu0 0.0
      %877 = vmatprep.subr.mxu0 0.0
      %878 = vmatpush1.msra.mxu0 0.0
      %879 = vmatprep.subr.mxu0 0.0
      %880 = vmatpush1.msra.mxu0 0.0
      %881 = vmatprep.subr.mxu0 0.0
      %882 = vmatpush1.msra.mxu0 0.0
      %883 = vmatprep.subr.mxu0 0.0
      %884 = vmatpush1.msra.mxu0 0.0
      %885 = vmatprep.subr.mxu0 0.0
      %886 = vmatpush1.msra.mxu0 0.0
      %887 = vmatprep.subr.mxu0 0.0
      %888 = vmatpush1.msra.mxu0 0.0
      %889 = vmatprep.subr.mxu0 0.0
      %890 = vmatpush1.msra.mxu0 0.0
      %891 = vmatprep.subr.mxu0 0.0
      %892 = vmatpush1.msra.mxu0 0.0
      %893 = vmatprep.subr.mxu0 0.0
      %894 = vmatpush1.msra.mxu0 0.0
      %895 = vmatprep.subr.mxu0 0.0
      %896 = vmatpush1.msra.mxu0 0.0
      %897 = vmatprep.subr.mxu0 0.0
      %898 = vmatpush1.msra.mxu0 0.0
      %899 = vmatprep.subr.mxu0 0.0
      %900 = vmatpush1.msra.mxu0 0.0
      %901 = vmatprep.mubr.f32.mxu0 0.0
      %902 = vmatmul.mubr.f32.gmra.mrb[0].mxu0 %v833
      %v903 = vpop.f32.mrb[0].mxu0
      %v904 = vadd.f32 0.0, %v903
      %v905 = vpop.f32.mrb[0].mxu0
      %906 = vmatprep.mubr.f32.mxu0 0.0
      %907 = vmatmul.mubr.f32.gmra.mrb[0].mxu0 %v834
      %v908 = vpop.f32.mrb[0].mxu0
      %v909 = vadd.f32 0.0, %v908
      %v910 = vpop.f32.mrb[0].mxu0
      %911 = vmatprep.mubr.f32.mxu0 0.0
      %912 = vmatmul.mubr.f32.gmra.mrb[0].mxu0 %v835
      %v913 = vpop.f32.mrb[0].mxu0
      %v914 = vadd.f32 0.0, %v913
      %v915 = vpop.f32.mrb[0].mxu0
      %916 = vmatprep.mubr.f32.mxu0 0.0
      %917 = vmatmul.mubr.f32.gmra.mrb[0].mxu0 %v836
      %v918 = vpop.f32.mrb[0].mxu0
      %v919 = vadd.f32 0.0, %v918
      %v920 = vpop.f32.mrb[0].mxu0
      %921 = vdwg.mxu0
      %922 = vmatprep.subr.mxu0 0.0
      %923 = vmatpush1.msra.mxu0 %v695
      %924 = vmatprep.subr.mxu0 0.0
      %925 = vmatpush1.msra.mxu0 %v698
      %926 = vmatprep.subr.mxu0 0.0
      %927 = vmatpush1.msra.mxu0 %v703
      %928 = vmatprep.subr.mxu0 0.0
      %929 = vmatpush1.msra.mxu0 %v706
      %930 = vmatprep.subr.mxu0 0.0
      %931 = vmatpush1.msra.mxu0 %v711
      %932 = vmatprep.subr.mxu0 0.0
      %933 = vmatpush1.msra.mxu0 %v714
      %934 = vmatprep.subr.mxu0 0.0
      %935 = vmatpush1.msra.mxu0 %v719
      %936 = vmatprep.subr.mxu0 0.0
      %937 = vmatpush1.msra.mxu0 %v722
      %938 = vmatprep.subr.mxu0 0.0
      %939 = vmatpush1.msra.mxu0 %v727
      %940 = vmatprep.subr.mxu0 0.0
      %941 = vmatpush1.msra.mxu0 %v730
      %942 = vmatprep.subr.mxu0 0.0
      %943 = vmatpush1.msra.mxu0 %v735
      %944 = vmatprep.subr.mxu0 0.0
      %945 = vmatpush1.msra.mxu0 %v738
      %946 = vmatprep.subr.mxu0 0.0
      %947 = vmatpush1.msra.mxu0 %v743
      %948 = vmatprep.subr.mxu0 0.0
      %949 = vmatpush1.msra.mxu0 %v746
      %950 = vmatprep.subr.mxu0 0.0
      %951 = vmatpush1.msra.mxu0 %v751
      %952 = vmatprep.subr.mxu0 0.0
      %953 = vmatpush1.msra.mxu0 %v754
      %954 = vmatprep.subr.mxu0 0.0
      %955 = vmatpush1.msra.mxu0 0.0
      %956 = vmatprep.subr.mxu0 0.0
      %957 = vmatpush1.msra.mxu0 0.0
      %958 = vmatprep.subr.mxu0 0.0
      %959 = vmatpush1.msra.mxu0 0.0
      %960 = vmatprep.subr.mxu0 0.0
      %961 = vmatpush1.msra.mxu0 0.0
      %962 = vmatprep.subr.mxu0 0.0
      %963 = vmatpush1.msra.mxu0 0.0
      %964 = vmatprep.subr.mxu0 0.0
      %965 = vmatpush1.msra.mxu0 0.0
      %966 = vmatprep.subr.mxu0 0.0
      %967 = vmatpush1.msra.mxu0 0.0
      %968 = vmatprep.subr.mxu0 0.0
      %969 = vmatpush1.msra.mxu0 0.0
      %970 = vmatprep.subr.mxu0 0.0
      %971 = vmatpush1.msra.mxu0 0.0
      %972 = vmatprep.subr.mxu0 0.0
      %973 = vmatpush1.msra.mxu0 0.0
      %974 = vmatprep.subr.mxu0 0.0
      %975 = vmatpush1.msra.mxu0 0.0
      %976 = vmatprep.subr.mxu0 0.0
      %977 = vmatpush1.msra.mxu0 0.0
      %978 = vmatprep.subr.mxu0 0.0
      %979 = vmatpush1.msra.mxu0 0.0
      %980 = vmatprep.subr.mxu0 0.0
      %981 = vmatpush1.msra.mxu0 0.0
      %982 = vmatprep.subr.mxu0 0.0
      %983 = vmatpush1.msra.mxu0 0.0
      %984 = vmatprep.subr.mxu0 0.0
      %985 = vmatpush1.msra.mxu0 0.0
      %986 = vmatprep.mubr.f32.mxu0 0.0
      %987 = vmatmul.mubr.f32.gmra.mrb[0].mxu0 %v825
      %v988 = vpop.f32.mrb[0].mxu0
      %v989 = vadd.f32 %v904, %v988
      %v990 = vpop.f32.mrb[0].mxu0
      %991 = vmatprep.mubr.f32.mxu0 0.0
      %992 = vmatmul.mubr.f32.gmra.mrb[0].mxu0 %v826
      %v993 = vpop.f32.mrb[0].mxu0
      %v994 = vadd.f32 %v909, %v993
      %v995 = vpop.f32.mrb[0].mxu0
      %996 = vmatprep.mubr.f32.mxu0 0.0
      %997 = vmatmul.mubr.f32.gmra.mrb[0].mxu0 %v827
      %v998 = vpop.f32.mrb[0].mxu0
      %v999 = vadd.f32 %v914, %v998
      %v1000 = vpop.f32.mrb[0].mxu0
      %1001 = vmatprep.mubr.f32.mxu0 0.0
      %1002 = vmatmul.mubr.f32.gmra.mrb[0].mxu0 %v828
      %v1003 = vpop.f32.mrb[0].mxu0
      %v1004 = vadd.f32 %v919, %v1003
      %v1005 = vpop.f32.mrb[0].mxu0
      %1006 = vdwg.mxu0
      %v1007 = vmax.f32 %v259, 1.0
      %v1008 = vmax.f32 %v260, 1.0
      %v1009 = vmax.f32 %v261, 1.0
      %v1010 = vmax.f32 %v262, 1.0
      %1012 = vset.pattern.permute.xlu0 64
      %1013 = vperm.xlu0 %1012, %v1007
      %v1014 = vpop.permute.xlu0 %1013
      %1017 = vset.pattern.permute.xlu0 64
      %1018 = vperm.xlu0 %1017, %v1008
      %v1019 = vpop.permute.xlu0 %1018
      %1022 = vset.pattern.permute.xlu0 64
      %1023 = vperm.xlu0 %1022, %v1009
      %v1024 = vpop.permute.xlu0 %1023
      %1027 = vset.pattern.permute.xlu0 64
      %1028 = vperm.xlu0 %1027, %v1010
      %v1029 = vpop.permute.xlu0 %1028
      %v1031 = vrcp.pop %v1014
      %v1032 = vmul.f32 %v989, %v1031
      %v1033 = vrcp.pop %v1019
      %v1034 = vmul.f32 %v994, %v1033
      %v1035 = vrcp.pop %v1024
      %v1036 = vmul.f32 %v999, %v1035
      %v1037 = vrcp.pop %v1029
      %v1038 = vmul.f32 %v1004, %v1037
      %v1039 = vlaneseq
      %v1040 = vshrl.u32 %v1039, 7
      %v1041 = vsub.s32 0, %v1040
      %v1042 = vrot.slane %v204, %v1041
      %v1044 = vsel %vm611, %v1032, 0
      %v1047 = vsel %vm611, %v1034, 0
      %v1050 = vsel %vm611, %v1036, 0
      %v1053 = vsel %vm611, %v1038, 0
      %1055 = vmatprep.subr.mxu0 0.0
      %1056 = vmatpush1.msra.mxu0 %v199
      %1057 = vmatprep.subr.mxu0 0.0
      %1058 = vmatpush1.msra.mxu0 %v200
      %1059 = vmatprep.subr.mxu0 0.0
      %1060 = vmatpush1.msra.mxu0 %v201
      %1061 = vmatprep.subr.mxu0 0.0
      %1062 = vmatpush1.msra.mxu0 %v202
      %1063 = vmatprep.subr.mxu0 0.0
      %1064 = vmatpush1.msra.mxu0 0.0
      %1065 = vmatprep.subr.mxu0 0.0
      %1066 = vmatpush1.msra.mxu0 0.0
      %1067 = vmatprep.subr.mxu0 0.0
      %1068 = vmatpush1.msra.mxu0 0.0
      %1069 = vmatprep.subr.mxu0 0.0
      %1070 = vmatpush1.msra.mxu0 0.0
      %1071 = vmatprep.subr.mxu0 0.0
      %1072 = vmatpush1.msra.mxu0 0.0
      %1073 = vmatprep.subr.mxu0 0.0
      %1074 = vmatpush1.msra.mxu0 0.0
      %1075 = vmatprep.subr.mxu0 0.0
      %1076 = vmatpush1.msra.mxu0 0.0
      %1077 = vmatprep.subr.mxu0 0.0
      %1078 = vmatpush1.msra.mxu0 0.0
      %1079 = vmatprep.subr.mxu0 0.0
      %1080 = vmatpush1.msra.mxu0 0.0
      %1081 = vmatprep.subr.mxu0 0.0
      %1082 = vmatpush1.msra.mxu0 0.0
      %1083 = vmatprep.subr.mxu0 0.0
      %1084 = vmatpush1.msra.mxu0 0.0
      %1085 = vmatprep.subr.mxu0 0.0
      %1086 = vmatpush1.msra.mxu0 0.0
      %1087 = vmatprep.subr.mxu0 0.0
      %1088 = vmatpush1.msra.mxu0 0.0
      %1089 = vmatprep.subr.mxu0 0.0
      %1090 = vmatpush1.msra.mxu0 0.0
      %1091 = vmatprep.subr.mxu0 0.0
      %1092 = vmatpush1.msra.mxu0 0.0
      %1093 = vmatprep.subr.mxu0 0.0
      %1094 = vmatpush1.msra.mxu0 0.0
      %1095 = vmatprep.subr.mxu0 0.0
      %1096 = vmatpush1.msra.mxu0 0.0
      %1097 = vmatprep.subr.mxu0 0.0
      %1098 = vmatpush1.msra.mxu0 0.0
      %1099 = vmatprep.subr.mxu0 0.0
      %1100 = vmatpush1.msra.mxu0 0.0
      %1101 = vmatprep.subr.mxu0 0.0
      %1102 = vmatpush1.msra.mxu0 0.0
      %1103 = vmatprep.subr.mxu0 0.0
      %1104 = vmatpush1.msra.mxu0 0.0
      %1105 = vmatprep.subr.mxu0 0.0
      %1106 = vmatpush1.msra.mxu0 0.0
      %1107 = vmatprep.subr.mxu0 0.0
      %1108 = vmatpush1.msra.mxu0 0.0
      %1109 = vmatprep.subr.mxu0 0.0
      %1110 = vmatpush1.msra.mxu0 0.0
      %1111 = vmatprep.subr.mxu0 0.0
      %1112 = vmatpush1.msra.mxu0 0.0
      %1113 = vmatprep.subr.mxu0 0.0
      %1114 = vmatpush1.msra.mxu0 0.0
      %1115 = vmatprep.subr.mxu0 0.0
      %1116 = vmatpush1.msra.mxu0 0.0
      %1117 = vmatprep.subr.mxu0 0.0
      %1118 = vmatpush1.msra.mxu0 0.0
      %1119 = vmatprep.mubr.f32.mxu0 0.0
      %1120 = vmatmul.mubr.f32.gmra.mrb[0].mxu0 %v1044
      %v1121 = vpop.f32.mrb[0].mxu0
      %v1122 = vadd.f32 %v1042, %v1121
      %v1123 = vpop.f32.mrb[0].mxu0
      %1124 = vmatprep.mubr.f32.mxu0 0.0
      %1125 = vmatmul.mubr.f32.gmra.mrb[0].mxu0 %v1047
      %v1126 = vpop.f32.mrb[0].mxu0
      %v1127 = vadd.f32 %v1042, %v1126
      %v1128 = vpop.f32.mrb[0].mxu0
      %1129 = vmatprep.mubr.f32.mxu0 0.0
      %1130 = vmatmul.mubr.f32.gmra.mrb[0].mxu0 %v1050
      %v1131 = vpop.f32.mrb[0].mxu0
      %v1132 = vadd.f32 %v1042, %v1131
      %v1133 = vpop.f32.mrb[0].mxu0
      %1134 = vmatprep.mubr.f32.mxu0 0.0
      %1135 = vmatmul.mubr.f32.gmra.mrb[0].mxu0 %v1053
      %v1136 = vpop.f32.mrb[0].mxu0
      %v1137 = vadd.f32 %v1042, %v1136
      %v1138 = vpop.f32.mrb[0].mxu0
      %1139 = vdwg.mxu0
      %v1140 = vmax.f32 %v1122, 0.0
      %v1141 = vmax.f32 %v1127, 0.0
      %v1142 = vmax.f32 %v1132, 0.0
      %v1143 = vmax.f32 %v1137, 0.0
      %v1144 = vlaneseq
      %v1145 = vshrl.u32 %v1144, 7
      %v1146 = vsub.s32 0, %v1145
      %v1147 = vrot.slane %v210, %v1146
      %v1149 = vsel %vm313, %v1140, 0
      %v1152 = vsel %vm313, %v1141, 0
      %v1155 = vsel %vm313, %v1142, 0
      %v1158 = vsel %vm313, %v1143, 0
      %1160 = vmatprep.subr.mxu0 0.0
      %1161 = vmatpush1.msra.mxu0 %v207
      %1162 = vmatprep.subr.mxu0 0.0
      %1163 = vmatpush1.msra.mxu0 %v208
      %1164 = vmatprep.subr.mxu0 0.0
      %1165 = vmatpush1.msra.mxu0 0.0
      %1166 = vmatprep.subr.mxu0 0.0
      %1167 = vmatpush1.msra.mxu0 0.0
      %1168 = vmatprep.subr.mxu0 0.0
      %1169 = vmatpush1.msra.mxu0 0.0
      %1170 = vmatprep.subr.mxu0 0.0
      %1171 = vmatpush1.msra.mxu0 0.0
      %1172 = vmatprep.subr.mxu0 0.0
      %1173 = vmatpush1.msra.mxu0 0.0
      %1174 = vmatprep.subr.mxu0 0.0
      %1175 = vmatpush1.msra.mxu0 0.0
      %1176 = vmatprep.subr.mxu0 0.0
      %1177 = vmatpush1.msra.mxu0 0.0
      %1178 = vmatprep.subr.mxu0 0.0
      %1179 = vmatpush1.msra.mxu0 0.0
      %1180 = vmatprep.subr.mxu0 0.0
      %1181 = vmatpush1.msra.mxu0 0.0
      %1182 = vmatprep.subr.mxu0 0.0
      %1183 = vmatpush1.msra.mxu0 0.0
      %1184 = vmatprep.subr.mxu0 0.0
      %1185 = vmatpush1.msra.mxu0 0.0
      %1186 = vmatprep.subr.mxu0 0.0
      %1187 = vmatpush1.msra.mxu0 0.0
      %1188 = vmatprep.subr.mxu0 0.0
      %1189 = vmatpush1.msra.mxu0 0.0
      %1190 = vmatprep.subr.mxu0 0.0
      %1191 = vmatpush1.msra.mxu0 0.0
      %1192 = vmatprep.subr.mxu0 0.0
      %1193 = vmatpush1.msra.mxu0 0.0
      %1194 = vmatprep.subr.mxu0 0.0
      %1195 = vmatpush1.msra.mxu0 0.0
      %1196 = vmatprep.subr.mxu0 0.0
      %1197 = vmatpush1.msra.mxu0 0.0
      %1198 = vmatprep.subr.mxu0 0.0
      %1199 = vmatpush1.msra.mxu0 0.0
      %1200 = vmatprep.subr.mxu0 0.0
      %1201 = vmatpush1.msra.mxu0 0.0
      %1202 = vmatprep.subr.mxu0 0.0
      %1203 = vmatpush1.msra.mxu0 0.0
      %1204 = vmatprep.subr.mxu0 0.0
      %1205 = vmatpush1.msra.mxu0 0.0
      %1206 = vmatprep.subr.mxu0 0.0
      %1207 = vmatpush1.msra.mxu0 0.0
      %1208 = vmatprep.subr.mxu0 0.0
      %1209 = vmatpush1.msra.mxu0 0.0
      %1210 = vmatprep.subr.mxu0 0.0
      %1211 = vmatpush1.msra.mxu0 0.0
      %1212 = vmatprep.subr.mxu0 0.0
      %1213 = vmatpush1.msra.mxu0 0.0
      %1214 = vmatprep.subr.mxu0 0.0
      %1215 = vmatpush1.msra.mxu0 0.0
      %1216 = vmatprep.subr.mxu0 0.0
      %1217 = vmatpush1.msra.mxu0 0.0
      %1218 = vmatprep.subr.mxu0 0.0
      %1219 = vmatpush1.msra.mxu0 0.0
      %1220 = vmatprep.subr.mxu0 0.0
      %1221 = vmatpush1.msra.mxu0 0.0
      %1222 = vmatprep.subr.mxu0 0.0
      %1223 = vmatpush1.msra.mxu0 0.0
      %1224 = vmatprep.mubr.f32.mxu0 0.0
      %1225 = vmatmul.mubr.f32.gmra.mrb[0].mxu0 %v1149
      %v1226 = vpop.f32.mrb[0].mxu0
      %v1227 = vadd.f32 %v1147, %v1226
      %v1228 = vpop.f32.mrb[0].mxu0
      %1229 = vmatprep.mubr.f32.mxu0 0.0
      %1230 = vmatmul.mubr.f32.gmra.mrb[0].mxu0 %v1152
      %v1231 = vpop.f32.mrb[0].mxu0
      %v1232 = vadd.f32 %v1147, %v1231
      %v1233 = vpop.f32.mrb[0].mxu0
      %1234 = vmatprep.mubr.f32.mxu0 0.0
      %1235 = vmatmul.mubr.f32.gmra.mrb[0].mxu0 %v1155
      %v1236 = vpop.f32.mrb[0].mxu0
      %v1237 = vadd.f32 %v1147, %v1236
      %v1238 = vpop.f32.mrb[0].mxu0
      %1239 = vmatprep.mubr.f32.mxu0 0.0
      %1240 = vmatmul.mubr.f32.gmra.mrb[0].mxu0 %v1158
      %v1241 = vpop.f32.mrb[0].mxu0
      %v1242 = vadd.f32 %v1147, %v1241
      %v1243 = vpop.f32.mrb[0].mxu0
      %1244 = vdwg.mxu0
      %vm1245 = vcmask 7168
      %1246 = vst.msk [vmem:[%s178] sm:$0xff] %vm1245, %v1227
      %1247 = vst.msk [vmem:[%s178 + $0x8] sm:$0xff] %vm1245, %v1232
      %1248 = vst.msk [vmem:[%s178 + $0x10] sm:$0xff] %vm1245, %v1237
      %1249 = vst.msk [vmem:[%s178 + $0x18] sm:$0xff] %vm1245, %v1242
      %p1250 = scmp.lt.s32.totalorder %s15, 3
      %s1251 = scalar_select %p1250, %s15, 3
      %s1252 = smul.addr %s1251, 4
      %s1253 = smul.addr %s1252, 8
      %s1254 = scalar_lea.vmem %s2, %s1253
      %p1255 = scmp.lt.s32.totalorder %s15, 3
      %s1256 = scalar_select %p1255, %s15, 3
      %s1257 = smul.addr %s1256, 16
      %s1258 = smul.addr %s1257, 4
      %s1259 = scalar_lea.vmem %s3, %s1258
      // Predicated region
      $region29: #{gad_forward.1} parent=27 // pred_check
        %p1260 = pneg %p80
      $region30: #{gad_forward.1} parent=27 // pred_check_branch
        %1262 = sbr.rel (%p1260) target = $region32
      $region31: #{gad_forward.1} parent=27 // pred_region
        _
      $region32: #{gad_forward.1} parent=27 // pred_fallthru
        _
      // Predicated region
      $region33: #{gad_forward.1} parent=27 // pred_check
        %p1263 = pneg %p106
      $region34: #{gad_forward.1} parent=27 // pred_check_branch
        %1265 = sbr.rel (%p1263) target = $region36
      $region35: #{gad_forward.1} parent=27 // pred_region
        _
      $region36: #{gad_forward.1} parent=27 // pred_fallthru
        _
    $region28: #{gad_forward.1} parent=5 // pred_fallthru
      _
    %p1266 = scmp.le.s32.totalorder 2, %s10
    // Predicated region
    $region37: #{gad_forward.1} parent=5 // pred_check
      %p1267 = pneg %p1266
    $region38: #{gad_forward.1} parent=5 // pred_check_branch
      %1269 = sbr.rel (%p1267) target = $region40
    $region39: #{gad_forward.1} parent=5 // pred_region
      %s1270 = ssub.s32 %s10, 2
      // Predicated region
      $region41: #{gad_forward.1} parent=39 // pred_check
        %p1271 = pneg %p86
      $region42: #{gad_forward.1} parent=39 // pred_check_branch
        %1273 = sbr.rel (%p1271) target = $region44
      $region43: #{gad_forward.1} parent=39 // pred_region
        %p1274 = scmp.lt.s32.totalorder %s16, 3
        %s1275 = scalar_select %p1274, %s16, 3
        %s1276 = smul.addr %s1275, 4
        %s1277 = smul.addr %s1276, 8
        %s1278 = scalar_lea.vmem %s2, %s1277
      $region44: #{gad_forward.1} parent=39 // pred_fallthru
        _
      // Predicated region
      $region45: #{gad_forward.1} parent=39 // pred_check
        %p1279 = pneg %p112
      $region46: #{gad_forward.1} parent=39 // pred_check_branch
        %1281 = sbr.rel (%p1279) target = $region48
      $region47: #{gad_forward.1} parent=39 // pred_region
        %p1282 = scmp.lt.s32.totalorder %s16, 3
        %s1283 = scalar_select %p1282, %s16, 3
        %s1284 = smul.addr %s1283, 16
        %s1285 = smul.addr %s1284, 4
        %s1286 = scalar_lea.vmem %s3, %s1285
      $region48: #{gad_forward.1} parent=39 // pred_fallthru
        _
    $region40: #{gad_forward.1} parent=5 // pred_fallthru
      _
  $region6: #{gad_forward.1} parent=0 // loop_footer
    %s14 = sadd.s32 1, %s10
  $region7: #{gad_forward.1} parent=0 // loop_footer_branch
    %9 = sbr.rel target = $region3
  $region8: #{gad_forward.1} parent=0 // loop_exit
    _

</llo_original>
